<compile_context>
chip_gen: v7x
topology: tpu7x:2x2x1
jax: 0.10.0
libtpu: 0.0.40
codegen_flags: <defaults>
</compile_context>

<pallas_src>
import functools
import math
import numpy as np

import jax
import jax.numpy as jnp
from jax.experimental import pallas as pl
from jax.experimental.pallas import tpu as pltpu

# ----------------------------- problem sizes ------------------------------
B, T, D, H = 2, 8, 32, 4          # batch, context, n_dim, n_attn_heads
HD = D // H                       # head dim
EPS = 1e-8
SCALE = 1.0 / math.sqrt(HD)
ROWS = B * T                      # rows processed in the single grid step


# ------------------------------ Pallas kernel -----------------------------
def attention_block_kernel(x_ref, xT_ref, wqh_ref, wkvT_ref, wo_ref,
                           g1r_ref, g1c_ref, g2r_ref,
                           w1_ref, w3_ref, w2_ref, mask_ref, o_ref,
                           *, approx_recip):
    rows = x_ref.shape[0]                                  # static (B*T)
    x = x_ref[...]                                         # (rows, D)
    xT = xT_ref[...]                                       # (D, rows)

    # ---- RMS norm 1, in both layouts (normal for Q, transposed for K/V) ----
    inv1 = jax.lax.rsqrt(jnp.mean(x * x, axis=-1, keepdims=True) + EPS)     # (rows, 1)
    xn = x * (g1r_ref[...] * inv1)                                           # (rows, D)
    inv1t = jax.lax.rsqrt(jnp.mean(xT * xT, axis=0, keepdims=True) + EPS)   # (1, rows)
    xnT = xT * (g1c_ref[...] * inv1t)                                        # (D, rows)

    # ---- fused K^T / V^T projection: heads land on SUBLANES (slices are free) ----
    kvT = jnp.dot(wkvT_ref[...], xnT, preferred_element_type=jnp.float32)    # (2D, rows)

    # ---- per-head scores (Q via pre-sliced per-head weights; plain MXU pushes) ----
    s_parts = []
    for h in range(H):                                     # static, H = 4
        q_h = jnp.dot(xn, wqh_ref[h], preferred_element_type=jnp.float32)    # (rows, HD)
        kT_h = kvT[h * HD:(h + 1) * HD, :]                                    # (HD, rows)
        s_parts.append(jnp.dot(q_h, kT_h, preferred_element_type=jnp.float32))

    # ---- ONE softmax over all heads; mask carries ALiBi + causal + batch blocks ----
    s = jnp.concatenate(s_parts, axis=0) + mask_ref[...]   # (H*rows, rows), sublane concat
    m = jnp.max(s, axis=-1, keepdims=True)
    e = jnp.exp(s - m)
    denom = jnp.sum(e, axis=-1, keepdims=True)
    if approx_recip:
        p = e * pl.reciprocal(denom, approx=True)          # EUP slot, off the VALU path
    else:
        p = e / denom

    # ---- per-head PV; head packing folded into the Wo accumulation ----
    x1 = x                                                 # residual 1 folded into acc
    for h in range(H):
        p_h = p[h * rows:(h + 1) * rows, :]                # (rows, rows) sublane slice
        vT_h = kvT[D + h * HD:D + (h + 1) * HD, :]         # (HD, rows)   sublane slice
        o_h = jax.lax.dot_general(                         # P_h @ V_h  (rhs transposed)
            p_h, vT_h, (((1,), (1,)), ((), ())),
            preferred_element_type=jnp.float32)            # (rows, HD)
        x1 = x1 + jnp.dot(o_h, wo_ref[h * HD:(h + 1) * HD, :],
                          preferred_element_type=jnp.float32)

    # ---- RMS norm 2 ----
    inv2 = jax.lax.rsqrt(jnp.mean(x1 * x1, axis=-1, keepdims=True) + EPS)
    x1n = x1 * (g2r_ref[...] * inv2)

    # ---- SwiGLU FFN; w1 / w3 kept as separate matmuls (no lane-32 split) ----
    h1 = jnp.dot(x1n, w1_ref[...], preferred_element_type=jnp.float32)
    h3 = jnp.dot(x1n, w3_ref[...], preferred_element_type=jnp.float32)
    gated = h1 * jax.nn.sigmoid(h1) * h3
    ffn = jnp.dot(gated, w2_ref[...], preferred_element_type=jnp.float32)

    # TODO(synk): dropout (p_dropout > 0) not implemented in-kernel; eval-mode p=0.
    o_ref[...] = (x1 + ffn).astype(o_ref.dtype)            # residual 2


# ------------------------------- wrapper -----------------------------------
def attention_block(x, params, stacked_mask, approx_recip=True):
    """x: (B, T, D) float32; params: dict of torch-convention (out, in) weights."""
    # torch Linear stores W as (out, in); y = x @ W^T.  All weight re-layout, per-head
    # slicing and scale folding happens here, once, at trace time (outside the kernel).
    wq_heads = (params["wq"].T * SCALE).reshape(D, H, HD).transpose(1, 0, 2)  # (H, D, HD)
    wkvT = jnp.concatenate([params["wk"], params["wv"]], axis=0)              # (2D, D)
    wo_t = params["wo"].T                                                     # (D, D)
    w1_t, w3_t, w2_t = params["w1"].T, params["w3"].T, params["w2"].T
    g1r = params["g1"].reshape(1, D)
    g1c = params["g1"].reshape(D, 1)
    g2r = params["g2"].reshape(1, D)

    x2d = x.reshape(ROWS, D)
    xT = x2d.T                                 # (D, ROWS) — tiny host/XLA-side transpose

    c2 = lambda i: (0, 0)
    c3 = lambda i: (0, 0, 0)

    # Single grid step for the whole batch (review: sharding B=2 across v7x's two
    # TensorCores is overhead-dominated; gate on rows-per-core, not chip generation).
    out2d = pl.pallas_call(
        functools.partial(attention_block_kernel, approx_recip=approx_recip),
        out_shape=jax.ShapeDtypeStruct((ROWS, D), x.dtype),
        grid=(1,),
        in_specs=[
            pl.BlockSpec((ROWS, D), c2),        # x
            pl.BlockSpec((D, ROWS), c2),        # x^T
            pl.BlockSpec((H, D, HD), c3),       # per-head (Wq^T * scale)
            pl.BlockSpec((2 * D, D), c2),       # [Wk ; Wv] (torch layout)
            pl.BlockSpec((D, D), c2),           # Wo^T
            pl.BlockSpec((1, D), c2),           # rms gamma 1 (row)
            pl.BlockSpec((D, 1), c2),           # rms gamma 1 (col)
            pl.BlockSpec((1, D), c2),           # rms gamma 2 (row)
            pl.BlockSpec((D, D), c2),           # W1^T
            pl.BlockSpec((D, D), c2),           # W3^T
            pl.BlockSpec((D, D), c2),           # W2^T
            pl.BlockSpec((H * ROWS, ROWS), c2), # stacked ALiBi+causal+batch-block mask
        ],
        out_specs=pl.BlockSpec((ROWS, D), c2),
        compiler_params=pltpu.CompilerParams(
            dimension_semantics=("arbitrary",)),
    )(x2d, xT, wq_heads, wkvT, wo_t, g1r, g1c, g2r, w1_t, w3_t, w2_t, stacked_mask)
    return out2d.reshape(B, T, D)


# -------------------------- ALiBi masks (host side) --------------------------
def generate_alibi_mask(n_ctx, n_heads):
    """(H, T, T) ALiBi mask, matching the torch reference."""
    j = np.arange(n_ctx)[:, None]        # query index
    i = np.arange(n_ctx)[None, :]        # key index
    base = np.where(i > j, -np.inf, -np.abs(j - i).astype(np.float32)).astype(np.float32)
    ratio = 2.0 ** (-8.0 / n_heads)
    slopes = np.array([ratio ** (h + 1) for h in range(n_heads)], np.float32)
    return jnp.asarray(base[None, :, :] * slopes[:, None, None], jnp.float32)


def build_stacked_mask(alibi_hTT, n_batch):
    """(H*B*T, B*T) mask in the kernel's stacked-score layout: head blocks stacked
    along sublanes; inside each head block the mask is batch-block-diagonal
    (cross-batch pairs = -inf) with ALiBi+causal on the diagonal blocks."""
    mask = np.asarray(alibi_hTT)                       # (H, T, T)
    n_heads, n_ctx, _ = mask.shape
    rows = n_batch * n_ctx
    big = np.full((n_heads, rows, rows), -np.inf, np.float32)
    for h in range(n_heads):
        for b in range(n_batch):
            big[h, b * n_ctx:(b + 1) * n_ctx, b * n_ctx:(b + 1) * n_ctx] = mask[h]
    return jnp.asarray(big.reshape(n_heads * rows, rows))


# ----------------------------- JAX reference --------------------------------
def reference(x, params, mask):
    def rms(v, g):
        ms = jnp.mean(v * v, axis=-1, keepdims=True)
        return v * g * jax.lax.rsqrt(ms + EPS)

    xn = rms(x, params["g1"])
    q = xn @ params["wq"].T
    k = xn @ params["wk"].T
    v = xn @ params["wv"].T
    qh = q.reshape(B, T, H, HD).transpose(0, 2, 1, 3)
    kh = k.reshape(B, T, H, HD).transpose(0, 2, 1, 3)
    vh = v.reshape(B, T, H, HD).transpose(0, 2, 1, 3)
    s = jnp.einsum("bhqd,bhkd->bhqk", qh, kh) * SCALE + mask[None]
    p = jax.nn.softmax(s, axis=-1)
    oh = jnp.einsum("bhqk,bhkd->bhqd", p, vh)
    o = oh.transpose(0, 2, 1, 3).reshape(B, T, D) @ params["wo"].T
    x1 = x + o
    x1n = rms(x1, params["g2"])
    ffn = (jax.nn.silu(x1n @ params["w1"].T) * (x1n @ params["w3"].T)) @ params["w2"].T
    return x1 + ffn


# --------------------------------- main --------------------------------------
if __name__ == "__main__":
    key = jax.random.PRNGKey(0)
    keys = jax.random.split(key, 9)
    x = jax.random.normal(keys[0], (B, T, D), jnp.float32)

    params = {
        "wq": 0.1 * jax.random.normal(keys[1], (D, D), jnp.float32),
        "wk": 0.1 * jax.random.normal(keys[2], (D, D), jnp.float32),
        "wv": 0.1 * jax.random.normal(keys[3], (D, D), jnp.float32),
        "wo": 0.1 * jax.random.normal(keys[4], (D, D), jnp.float32),
        "g1": jnp.ones((D,), jnp.float32),
        "g2": jnp.ones((D,), jnp.float32),
        "w1": 0.1 * jax.random.normal(keys[5], (D, D), jnp.float32),
        "w2": 0.1 * jax.random.normal(keys[6], (D, D), jnp.float32),
        "w3": 0.1 * jax.random.normal(keys[7], (D, D), jnp.float32),
    }
    alibi = generate_alibi_mask(T, H)              # (H, T, T) — used by the reference
    stacked_mask = build_stacked_mask(alibi, B)    # (H*B*T, B*T) — used by the kernel

    out = jax.block_until_ready(attention_block(x, params, stacked_mask))
    ref = jax.block_until_ready(reference(x, params, alibi))

    assert out.shape == (B, T, D) and out.dtype == jnp.float32
    assert np.allclose(np.asarray(out), np.asarray(ref), rtol=2e-2, atol=2e-2), \
        "Pallas kernel output diverges from JAX reference"

    print("KERNEL_OK")
</pallas_src>

<mosaic_0001>
module attributes {stable_mosaic.version = 11 : i64} {
  func.func @attention_block_kernel(%arg0: i32, %arg1: memref<16x32xf32, #tpu.memory_space<vmem>>, %arg2: memref<32x16xf32, #tpu.memory_space<vmem>>, %arg3: memref<4x32x8xf32, #tpu.memory_space<vmem>>, %arg4: memref<64x32xf32, #tpu.memory_space<vmem>>, %arg5: memref<32x32xf32, #tpu.memory_space<vmem>>, %arg6: memref<1x32xf32, #tpu.memory_space<vmem>>, %arg7: memref<32x1xf32, #tpu.memory_space<vmem>>, %arg8: memref<1x32xf32, #tpu.memory_space<vmem>>, %arg9: memref<32x32xf32, #tpu.memory_space<vmem>>, %arg10: memref<32x32xf32, #tpu.memory_space<vmem>>, %arg11: memref<32x32xf32, #tpu.memory_space<vmem>>, %arg12: memref<64x16xf32, #tpu.memory_space<vmem>>, %arg13: memref<16x32xf32, #tpu.memory_space<vmem>>) attributes {dimension_semantics = [#tpu.dimension_semantics<arbitrary>], iteration_bounds = array<i64: 1>, scalar_prefetch = 0 : i64, scratch_operands = 0 : i64, tpu.core_type = #tpu.core_type<tc>, window_params = [{pipeline_mode = #tpu.pipeline_mode<synchronous>, transform_indices = @transform_0, window_bounds = array<i64: 16, 32>}, {pipeline_mode = #tpu.pipeline_mode<synchronous>, transform_indices = @transform_1, window_bounds = array<i64: 32, 16>}, {pipeline_mode = #tpu.pipeline_mode<synchronous>, transform_indices = @transform_2, window_bounds = array<i64: 4, 32, 8>}, {pipeline_mode = #tpu.pipeline_mode<synchronous>, transform_indices = @transform_3, window_bounds = array<i64: 64, 32>}, {pipeline_mode = #tpu.pipeline_mode<synchronous>, transform_indices = @transform_4, window_bounds = array<i64: 32, 32>}, {pipeline_mode = #tpu.pipeline_mode<synchronous>, transform_indices = @transform_5, window_bounds = array<i64: 1, 32>}, {pipeline_mode = #tpu.pipeline_mode<synchronous>, transform_indices = @transform_6, window_bounds = array<i64: 32, 1>}, {pipeline_mode = #tpu.pipeline_mode<synchronous>, transform_indices = @transform_7, window_bounds = array<i64: 1, 32>}, {pipeline_mode = #tpu.pipeline_mode<synchronous>, transform_indices = @transform_8, window_bounds = array<i64: 32, 32>}, {pipeline_mode = #tpu.pipeline_mode<synchronous>, transform_indices = @transform_9, window_bounds = array<i64: 32, 32>}, {pipeline_mode = #tpu.pipeline_mode<synchronous>, transform_indices = @transform_10, window_bounds = array<i64: 32, 32>}, {pipeline_mode = #tpu.pipeline_mode<synchronous>, transform_indices = @transform_11, window_bounds = array<i64: 64, 16>}, {pipeline_mode = #tpu.pipeline_mode<synchronous>, transform_indices = @transform_12, window_bounds = array<i64: 16, 32>}]} {
    %c0 = arith.constant 0 : index
    %c0_0 = arith.constant 0 : index
    %0 = vector.load %arg1[%c0, %c0_0] : memref<16x32xf32, #tpu.memory_space<vmem>>, vector<16x32xf32>
    %c0_1 = arith.constant 0 : index
    %c0_2 = arith.constant 0 : index
    %1 = vector.load %arg2[%c0_1, %c0_2] : memref<32x16xf32, #tpu.memory_space<vmem>>, vector<32x16xf32>
    %2 = arith.mulf %0, %0 : vector<16x32xf32>
    %cst = arith.constant dense<0.000000e+00> : vector<16xf32>
    %3 = vector.multi_reduction <add>, %2, %cst [1] : vector<16x32xf32> to vector<16xf32>
    %4 = vector.shape_cast %3 : vector<16xf32> to vector<16x1xf32>
    %cst_3 = arith.constant 3.200000e+01 : f32
    %5 = vector.broadcast %cst_3 : f32 to vector<16x1xf32>
    %6 = arith.divf %4, %5 : vector<16x1xf32>
    %cst_4 = arith.constant 9.99999993E-9 : f32
    %7 = vector.broadcast %cst_4 : f32 to vector<16x1xf32>
    %8 = arith.addf %6, %7 : vector<16x1xf32>
    %9 = math.rsqrt %8 : vector<16x1xf32>
    %c0_5 = arith.constant 0 : index
    %c0_6 = arith.constant 0 : index
    %10 = vector.load %arg6[%c0_5, %c0_6] : memref<1x32xf32, #tpu.memory_space<vmem>>, vector<1x32xf32>
    %11 = vector.broadcast %10 : vector<1x32xf32> to vector<16x32xf32>
    %12 = vector.broadcast %9 : vector<16x1xf32> to vector<16x32xf32>
    %13 = arith.mulf %11, %12 : vector<16x32xf32>
    %14 = arith.mulf %0, %13 : vector<16x32xf32>
    %15 = arith.mulf %1, %1 : vector<32x16xf32>
    %cst_7 = arith.constant dense<0.000000e+00> : vector<16xf32>
    %16 = vector.multi_reduction <add>, %15, %cst_7 [0] : vector<32x16xf32> to vector<16xf32>
    %17 = vector.shape_cast %16 : vector<16xf32> to vector<1x16xf32>
    %cst_8 = arith.constant 3.200000e+01 : f32
    %18 = vector.broadcast %cst_8 : f32 to vector<1x16xf32>
    %19 = arith.divf %17, %18 : vector<1x16xf32>
    %cst_9 = arith.constant 9.99999993E-9 : f32
    %20 = vector.broadcast %cst_9 : f32 to vector<1x16xf32>
    %21 = arith.addf %19, %20 : vector<1x16xf32>
    %22 = math.rsqrt %21 : vector<1x16xf32>
    %c0_10 = arith.constant 0 : index
    %c0_11 = arith.constant 0 : index
    %23 = vector.load %arg7[%c0_10, %c0_11] : memref<32x1xf32, #tpu.memory_space<vmem>>, vector<32x1xf32>
    %24 = vector.broadcast %23 : vector<32x1xf32> to vector<32x16xf32>
    %25 = vector.broadcast %22 : vector<1x16xf32> to vector<32x16xf32>
    %26 = arith.mulf %24, %25 : vector<32x16xf32>
    %27 = arith.mulf %1, %26 : vector<32x16xf32>
    %c0_12 = arith.constant 0 : index
    %c0_13 = arith.constant 0 : index
    %28 = vector.load %arg4[%c0_12, %c0_13] : memref<64x32xf32, #tpu.memory_space<vmem>>, vector<64x32xf32>
    %cst_14 = arith.constant dense<0.000000e+00> : vector<64x16xf32>
    %29 = tpu.matmul %28, %27, %cst_14 {dimension_numbers = #tpu.dot_dimension_numbers<[1], [0], [0], [1], [0, 0, 1, 1], [], []>} : vector<64x32xf32>, vector<32x16xf32>, vector<64x16xf32> -> vector<64x16xf32>
    %c0_15 = arith.constant 0 : index
    %c0_16 = arith.constant 0 : index
    %c0_17 = arith.constant 0 : index
    %30 = vector.load %arg3[%c0_15, %c0_16, %c0_17] : memref<4x32x8xf32, #tpu.memory_space<vmem>>, vector<1x32x8xf32>
    %31 = vector.shape_cast %30 : vector<1x32x8xf32> to vector<32x8xf32>
    %cst_18 = arith.constant dense<0.000000e+00> : vector<16x8xf32>
    %32 = tpu.matmul %14, %31, %cst_18 {dimension_numbers = #tpu.dot_dimension_numbers<[1], [0], [0], [1], [0, 0, 1, 1], [], []>} : vector<16x32xf32>, vector<32x8xf32>, vector<16x8xf32> -> vector<16x8xf32>
    %33 = vector.extract_strided_slice %29 {offsets = [0, 0], sizes = [8, 16], strides = [1, 1]} : vector<64x16xf32> to vector<8x16xf32>
    %cst_19 = arith.constant dense<0.000000e+00> : vector<16x16xf32>
    %34 = tpu.matmul %32, %33, %cst_19 {dimension_numbers = #tpu.dot_dimension_numbers<[1], [0], [0], [1], [0, 0, 1, 1], [], []>} : vector<16x8xf32>, vector<8x16xf32>, vector<16x16xf32> -> vector<16x16xf32>
    %c1 = arith.constant 1 : index
    %c0_20 = arith.constant 0 : index
    %c0_21 = arith.constant 0 : index
    %35 = vector.load %arg3[%c1, %c0_20, %c0_21] : memref<4x32x8xf32, #tpu.memory_space<vmem>>, vector<1x32x8xf32>
    %36 = vector.shape_cast %35 : vector<1x32x8xf32> to vector<32x8xf32>
    %cst_22 = arith.constant dense<0.000000e+00> : vector<16x8xf32>
    %37 = tpu.matmul %14, %36, %cst_22 {dimension_numbers = #tpu.dot_dimension_numbers<[1], [0], [0], [1], [0, 0, 1, 1], [], []>} : vector<16x32xf32>, vector<32x8xf32>, vector<16x8xf32> -> vector<16x8xf32>
    %38 = vector.extract_strided_slice %29 {offsets = [8, 0], sizes = [8, 16], strides = [1, 1]} : vector<64x16xf32> to vector<8x16xf32>
    %cst_23 = arith.constant dense<0.000000e+00> : vector<16x16xf32>
    %39 = tpu.matmul %37, %38, %cst_23 {dimension_numbers = #tpu.dot_dimension_numbers<[1], [0], [0], [1], [0, 0, 1, 1], [], []>} : vector<16x8xf32>, vector<8x16xf32>, vector<16x16xf32> -> vector<16x16xf32>
    %c2 = arith.constant 2 : index
    %c0_24 = arith.constant 0 : index
    %c0_25 = arith.constant 0 : index
    %40 = vector.load %arg3[%c2, %c0_24, %c0_25] : memref<4x32x8xf32, #tpu.memory_space<vmem>>, vector<1x32x8xf32>
    %41 = vector.shape_cast %40 : vector<1x32x8xf32> to vector<32x8xf32>
    %cst_26 = arith.constant dense<0.000000e+00> : vector<16x8xf32>
    %42 = tpu.matmul %14, %41, %cst_26 {dimension_numbers = #tpu.dot_dimension_numbers<[1], [0], [0], [1], [0, 0, 1, 1], [], []>} : vector<16x32xf32>, vector<32x8xf32>, vector<16x8xf32> -> vector<16x8xf32>
    %43 = vector.extract_strided_slice %29 {offsets = [16, 0], sizes = [8, 16], strides = [1, 1]} : vector<64x16xf32> to vector<8x16xf32>
    %cst_27 = arith.constant dense<0.000000e+00> : vector<16x16xf32>
    %44 = tpu.matmul %42, %43, %cst_27 {dimension_numbers = #tpu.dot_dimension_numbers<[1], [0], [0], [1], [0, 0, 1, 1], [], []>} : vector<16x8xf32>, vector<8x16xf32>, vector<16x16xf32> -> vector<16x16xf32>
    %c3 = arith.constant 3 : index
    %c0_28 = arith.constant 0 : index
    %c0_29 = arith.constant 0 : index
    %45 = vector.load %arg3[%c3, %c0_28, %c0_29] : memref<4x32x8xf32, #tpu.memory_space<vmem>>, vector<1x32x8xf32>
    %46 = vector.shape_cast %45 : vector<1x32x8xf32> to vector<32x8xf32>
    %cst_30 = arith.constant dense<0.000000e+00> : vector<16x8xf32>
    %47 = tpu.matmul %14, %46, %cst_30 {dimension_numbers = #tpu.dot_dimension_numbers<[1], [0], [0], [1], [0, 0, 1, 1], [], []>} : vector<16x32xf32>, vector<32x8xf32>, vector<16x8xf32> -> vector<16x8xf32>
    %48 = vector.extract_strided_slice %29 {offsets = [24, 0], sizes = [8, 16], strides = [1, 1]} : vector<64x16xf32> to vector<8x16xf32>
    %cst_31 = arith.constant dense<0.000000e+00> : vector<16x16xf32>
    %49 = tpu.matmul %47, %48, %cst_31 {dimension_numbers = #tpu.dot_dimension_numbers<[1], [0], [0], [1], [0, 0, 1, 1], [], []>} : vector<16x8xf32>, vector<8x16xf32>, vector<16x16xf32> -> vector<16x16xf32>
    %50 = tpu.concatenate %34, %39, %44, %49 in 0 : vector<16x16xf32>, vector<16x16xf32>, vector<16x16xf32>, vector<16x16xf32> -> vector<64x16xf32>
    %c0_32 = arith.constant 0 : index
    %c0_33 = arith.constant 0 : index
    %51 = vector.load %arg12[%c0_32, %c0_33] : memref<64x16xf32, #tpu.memory_space<vmem>>, vector<64x16xf32>
    %52 = arith.addf %50, %51 : vector<64x16xf32>
    %cst_34 = arith.constant dense<0xFF800000> : vector<64xf32>
    %53 = vector.multi_reduction <maximumf>, %52, %cst_34 [1] : vector<64x16xf32> to vector<64xf32>
    %54 = vector.shape_cast %53 : vector<64xf32> to vector<64x1xf32>
    %55 = vector.broadcast %54 : vector<64x1xf32> to vector<64x16xf32>
    %56 = arith.subf %52, %55 : vector<64x16xf32>
    %57 = math.exp %56 : vector<64x16xf32>
    %cst_35 = arith.constant dense<0.000000e+00> : vector<64xf32>
    %58 = vector.multi_reduction <add>, %57, %cst_35 [1] : vector<64x16xf32> to vector<64xf32>
    %59 = vector.shape_cast %58 : vector<64xf32> to vector<64x1xf32>
    %60 = tpu.reciprocal %59 {approx = true} : vector<64x1xf32> -> vector<64x1xf32>
    %61 = vector.broadcast %60 : vector<64x1xf32> to vector<64x16xf32>
    %62 = arith.mulf %57, %61 : vector<64x16xf32>
    %63 = vector.extract_strided_slice %62 {offsets = [0, 0], sizes = [16, 16], strides = [1, 1]} : vector<64x16xf32> to vector<16x16xf32>
    %64 = vector.extract_strided_slice %29 {offsets = [32, 0], sizes = [8, 16], strides = [1, 1]} : vector<64x16xf32> to vector<8x16xf32>
    %cst_36 = arith.constant dense<0.000000e+00> : vector<16x8xf32>
    %65 = tpu.matmul %63, %64, %cst_36 {dimension_numbers = #tpu.dot_dimension_numbers<[1], [1], [0], [0], [0, 0, 1, 0], [], []>} : vector<16x16xf32>, vector<8x16xf32>, vector<16x8xf32> -> vector<16x8xf32>
    %c0_37 = arith.constant 0 : index
    %c0_38 = arith.constant 0 : index
    %66 = vector.load %arg5[%c0_37, %c0_38] : memref<32x32xf32, #tpu.memory_space<vmem>>, vector<8x32xf32>
    %cst_39 = arith.constant dense<0.000000e+00> : vector<16x32xf32>
    %67 = tpu.matmul %65, %66, %cst_39 {dimension_numbers = #tpu.dot_dimension_numbers<[1], [0], [0], [1], [0, 0, 1, 1], [], []>} : vector<16x8xf32>, vector<8x32xf32>, vector<16x32xf32> -> vector<16x32xf32>
    %68 = arith.addf %0, %67 : vector<16x32xf32>
    %69 = vector.extract_strided_slice %62 {offsets = [16, 0], sizes = [16, 16], strides = [1, 1]} : vector<64x16xf32> to vector<16x16xf32>
    %70 = vector.extract_strided_slice %29 {offsets = [40, 0], sizes = [8, 16], strides = [1, 1]} : vector<64x16xf32> to vector<8x16xf32>
    %cst_40 = arith.constant dense<0.000000e+00> : vector<16x8xf32>
    %71 = tpu.matmul %69, %70, %cst_40 {dimension_numbers = #tpu.dot_dimension_numbers<[1], [1], [0], [0], [0, 0, 1, 0], [], []>} : vector<16x16xf32>, vector<8x16xf32>, vector<16x8xf32> -> vector<16x8xf32>
    %c8 = arith.constant 8 : index
    %c0_41 = arith.constant 0 : index
    %72 = vector.load %arg5[%c8, %c0_41] : memref<32x32xf32, #tpu.memory_space<vmem>>, vector<8x32xf32>
    %cst_42 = arith.constant dense<0.000000e+00> : vector<16x32xf32>
    %73 = tpu.matmul %71, %72, %cst_42 {dimension_numbers = #tpu.dot_dimension_numbers<[1], [0], [0], [1], [0, 0, 1, 1], [], []>} : vector<16x8xf32>, vector<8x32xf32>, vector<16x32xf32> -> vector<16x32xf32>
    %74 = arith.addf %68, %73 : vector<16x32xf32>
    %75 = vector.extract_strided_slice %62 {offsets = [32, 0], sizes = [16, 16], strides = [1, 1]} : vector<64x16xf32> to vector<16x16xf32>
    %76 = vector.extract_strided_slice %29 {offsets = [48, 0], sizes = [8, 16], strides = [1, 1]} : vector<64x16xf32> to vector<8x16xf32>
    %cst_43 = arith.constant dense<0.000000e+00> : vector<16x8xf32>
    %77 = tpu.matmul %75, %76, %cst_43 {dimension_numbers = #tpu.dot_dimension_numbers<[1], [1], [0], [0], [0, 0, 1, 0], [], []>} : vector<16x16xf32>, vector<8x16xf32>, vector<16x8xf32> -> vector<16x8xf32>
    %c16 = arith.constant 16 : index
    %c0_44 = arith.constant 0 : index
    %78 = vector.load %arg5[%c16, %c0_44] : memref<32x32xf32, #tpu.memory_space<vmem>>, vector<8x32xf32>
    %cst_45 = arith.constant dense<0.000000e+00> : vector<16x32xf32>
    %79 = tpu.matmul %77, %78, %cst_45 {dimension_numbers = #tpu.dot_dimension_numbers<[1], [0], [0], [1], [0, 0, 1, 1], [], []>} : vector<16x8xf32>, vector<8x32xf32>, vector<16x32xf32> -> vector<16x32xf32>
    %80 = arith.addf %74, %79 : vector<16x32xf32>
    %81 = vector.extract_strided_slice %62 {offsets = [48, 0], sizes = [16, 16], strides = [1, 1]} : vector<64x16xf32> to vector<16x16xf32>
    %82 = vector.extract_strided_slice %29 {offsets = [56, 0], sizes = [8, 16], strides = [1, 1]} : vector<64x16xf32> to vector<8x16xf32>
    %cst_46 = arith.constant dense<0.000000e+00> : vector<16x8xf32>
    %83 = tpu.matmul %81, %82, %cst_46 {dimension_numbers = #tpu.dot_dimension_numbers<[1], [1], [0], [0], [0, 0, 1, 0], [], []>} : vector<16x16xf32>, vector<8x16xf32>, vector<16x8xf32> -> vector<16x8xf32>
    %c24 = arith.constant 24 : index
    %c0_47 = arith.constant 0 : index
    %84 = vector.load %arg5[%c24, %c0_47] : memref<32x32xf32, #tpu.memory_space<vmem>>, vector<8x32xf32>
    %cst_48 = arith.constant dense<0.000000e+00> : vector<16x32xf32>
    %85 = tpu.matmul %83, %84, %cst_48 {dimension_numbers = #tpu.dot_dimension_numbers<[1], [0], [0], [1], [0, 0, 1, 1], [], []>} : vector<16x8xf32>, vector<8x32xf32>, vector<16x32xf32> -> vector<16x32xf32>
    %86 = arith.addf %80, %85 : vector<16x32xf32>
    %87 = arith.mulf %86, %86 : vector<16x32xf32>
    %cst_49 = arith.constant dense<0.000000e+00> : vector<16xf32>
    %88 = vector.multi_reduction <add>, %87, %cst_49 [1] : vector<16x32xf32> to vector<16xf32>
    %89 = vector.shape_cast %88 : vector<16xf32> to vector<16x1xf32>
    %cst_50 = arith.constant 3.200000e+01 : f32
    %90 = vector.broadcast %cst_50 : f32 to vector<16x1xf32>
    %91 = arith.divf %89, %90 : vector<16x1xf32>
    %cst_51 = arith.constant 9.99999993E-9 : f32
    %92 = vector.broadcast %cst_51 : f32 to vector<16x1xf32>
    %93 = arith.addf %91, %92 : vector<16x1xf32>
    %94 = math.rsqrt %93 : vector<16x1xf32>
    %c0_52 = arith.constant 0 : index
    %c0_53 = arith.constant 0 : index
    %95 = vector.load %arg8[%c0_52, %c0_53] : memref<1x32xf32, #tpu.memory_space<vmem>>, vector<1x32xf32>
    %96 = vector.broadcast %95 : vector<1x32xf32> to vector<16x32xf32>
    %97 = vector.broadcast %94 : vector<16x1xf32> to vector<16x32xf32>
    %98 = arith.mulf %96, %97 : vector<16x32xf32>
    %99 = arith.mulf %86, %98 : vector<16x32xf32>
    %c0_54 = arith.constant 0 : index
    %c0_55 = arith.constant 0 : index
    %100 = vector.load %arg9[%c0_54, %c0_55] : memref<32x32xf32, #tpu.memory_space<vmem>>, vector<32x32xf32>
    %cst_56 = arith.constant dense<0.000000e+00> : vector<16x32xf32>
    %101 = tpu.matmul %99, %100, %cst_56 {dimension_numbers = #tpu.dot_dimension_numbers<[1], [0], [0], [1], [0, 0, 1, 1], [], []>} : vector<16x32xf32>, vector<32x32xf32>, vector<16x32xf32> -> vector<16x32xf32>
    %c0_57 = arith.constant 0 : index
    %c0_58 = arith.constant 0 : index
    %102 = vector.load %arg10[%c0_57, %c0_58] : memref<32x32xf32, #tpu.memory_space<vmem>>, vector<32x32xf32>
    %cst_59 = arith.constant dense<0.000000e+00> : vector<16x32xf32>
    %103 = tpu.matmul %99, %102, %cst_59 {dimension_numbers = #tpu.dot_dimension_numbers<[1], [0], [0], [1], [0, 0, 1, 1], [], []>} : vector<16x32xf32>, vector<32x32xf32>, vector<16x32xf32> -> vector<16x32xf32>
    %104 = arith.negf %101 : vector<16x32xf32>
    %105 = math.exp %104 : vector<16x32xf32>
    %cst_60 = arith.constant 1.000000e+00 : f32
    %106 = vector.broadcast %cst_60 : f32 to vector<16x32xf32>
    %107 = arith.addf %106, %105 : vector<16x32xf32>
    %108 = arith.divf %106, %107 : vector<16x32xf32>
    %109 = arith.mulf %101, %108 : vector<16x32xf32>
    %110 = arith.mulf %109, %103 : vector<16x32xf32>
    %c0_61 = arith.constant 0 : index
    %c0_62 = arith.constant 0 : index
    %111 = vector.load %arg11[%c0_61, %c0_62] : memref<32x32xf32, #tpu.memory_space<vmem>>, vector<32x32xf32>
    %cst_63 = arith.constant dense<0.000000e+00> : vector<16x32xf32>
    %112 = tpu.matmul %110, %111, %cst_63 {dimension_numbers = #tpu.dot_dimension_numbers<[1], [0], [0], [1], [0, 0, 1, 1], [], []>} : vector<16x32xf32>, vector<32x32xf32>, vector<16x32xf32> -> vector<16x32xf32>
    %113 = arith.addf %86, %112 : vector<16x32xf32>
    %c0_64 = arith.constant 0 : index
    %c0_65 = arith.constant 0 : index
    %114 = vector.load %arg13[%c0_64, %c0_65] : memref<16x32xf32, #tpu.memory_space<vmem>>, vector<16x32xf32>
    tpu.vector_store %arg13[%c0_64, %c0_65], %113 {strides = array<i32>} : memref<16x32xf32, #tpu.memory_space<vmem>>, vector<16x32xf32>,
    return
  }
  func.func @transform_0(%arg0: i32) -> (i32, i32) {
    %c0_i32 = arith.constant 0 : i32
    %c0_i32_0 = arith.constant 0 : i32
    %c0_i32_1 = arith.constant 0 : i32
    return %c0_i32, %c0_i32_0 : i32, i32
  }
  func.func @transform_1(%arg0: i32) -> (i32, i32) {
    %c0_i32 = arith.constant 0 : i32
    %c0_i32_0 = arith.constant 0 : i32
    %c0_i32_1 = arith.constant 0 : i32
    return %c0_i32, %c0_i32_0 : i32, i32
  }
  func.func @transform_2(%arg0: i32) -> (i32, i32, i32) {
    %c0_i32 = arith.constant 0 : i32
    %c0_i32_0 = arith.constant 0 : i32
    %c0_i32_1 = arith.constant 0 : i32
    %c0_i32_2 = arith.constant 0 : i32
    return %c0_i32, %c0_i32_0, %c0_i32_1 : i32, i32, i32
  }
  func.func @transform_3(%arg0: i32) -> (i32, i32) {
    %c0_i32 = arith.constant 0 : i32
    %c0_i32_0 = arith.constant 0 : i32
    %c0_i32_1 = arith.constant 0 : i32
    return %c0_i32, %c0_i32_0 : i32, i32
  }
  func.func @transform_4(%arg0: i32) -> (i32, i32) {
    %c0_i32 = arith.constant 0 : i32
    %c0_i32_0 = arith.constant 0 : i32
    %c0_i32_1 = arith.constant 0 : i32
    return %c0_i32, %c0_i32_0 : i32, i32
  }
  func.func @transform_5(%arg0: i32) -> (i32, i32) {
    %c0_i32 = arith.constant 0 : i32
    %c0_i32_0 = arith.constant 0 : i32
    %c0_i32_1 = arith.constant 0 : i32
    return %c0_i32, %c0_i32_0 : i32, i32
  }
  func.func @transform_6(%arg0: i32) -> (i32, i32) {
    %c0_i32 = arith.constant 0 : i32
    %c0_i32_0 = arith.constant 0 : i32
    %c0_i32_1 = arith.constant 0 : i32
    return %c0_i32, %c0_i32_0 : i32, i32
  }
  func.func @transform_7(%arg0: i32) -> (i32, i32) {
    %c0_i32 = arith.constant 0 : i32
    %c0_i32_0 = arith.constant 0 : i32
    %c0_i32_1 = arith.constant 0 : i32
    return %c0_i32, %c0_i32_0 : i32, i32
  }
  func.func @transform_8(%arg0: i32) -> (i32, i32) {
    %c0_i32 = arith.constant 0 : i32
    %c0_i32_0 = arith.constant 0 : i32
    %c0_i32_1 = arith.constant 0 : i32
    return %c0_i32, %c0_i32_0 : i32, i32
  }
  func.func @transform_9(%arg0: i32) -> (i32, i32) {
    %c0_i32 = arith.constant 0 : i32
    %c0_i32_0 = arith.constant 0 : i32
    %c0_i32_1 = arith.constant 0 : i32
    return %c0_i32, %c0_i32_0 : i32, i32
  }
  func.func @transform_10(%arg0: i32) -> (i32, i32) {
    %c0_i32 = arith.constant 0 : i32
    %c0_i32_0 = arith.constant 0 : i32
    %c0_i32_1 = arith.constant 0 : i32
    return %c0_i32, %c0_i32_0 : i32, i32
  }
  func.func @transform_11(%arg0: i32) -> (i32, i32) {
    %c0_i32 = arith.constant 0 : i32
    %c0_i32_0 = arith.constant 0 : i32
    %c0_i32_1 = arith.constant 0 : i32
    return %c0_i32, %c0_i32_0 : i32, i32
  }
  func.func @transform_12(%arg0: i32) -> (i32, i32) {
    %c0_i32 = arith.constant 0 : i32
    %c0_i32_0 = arith.constant 0 : i32
    %c0_i32_1 = arith.constant 0 : i32
    return %c0_i32, %c0_i32_0 : i32, i32
  }
}

</mosaic_0001>

<llo_original>
// kernel: tpu_custom_call.1
$region0: #{tpu_custom_call.1}
  #allocation0 [shape = 'u32[]', space=smem, size = 0x4, offset = 0x4, fixed_abs, tag = 'smem constant byte address 0x4 - core index']
  #allocation1 [shape = 'u32[144,128]{1,0:T(1,128)}', space=vmem, size = 0x12000, scoped, tag = 'internal scratch']
  %s0 = inlined_call_operand.vmem [shape: f32[16,32], index: 0, kind: input, shape index: {}]
  %s1 = inlined_call_operand.vmem [shape: f32[32,16], index: 1, kind: input, shape index: {}]
  %s2 = inlined_call_operand.vmem [shape: f32[4,32,8], index: 2, kind: input, shape index: {}]
  %s3 = inlined_call_operand.vmem [shape: f32[64,32], index: 3, kind: input, shape index: {}]
  %s4 = inlined_call_operand.vmem [shape: f32[32,32], index: 4, kind: input, shape index: {}]
  %s5 = inlined_call_operand.vmem [shape: f32[1,32], index: 5, kind: input, shape index: {}]
  %s6 = inlined_call_operand.vmem [shape: f32[32,1], index: 6, kind: input, shape index: {}]
  %s7 = inlined_call_operand.vmem [shape: f32[1,32], index: 7, kind: input, shape index: {}]
  %s8 = inlined_call_operand.vmem [shape: f32[32,32], index: 8, kind: input, shape index: {}]
  %s9 = inlined_call_operand.vmem [shape: f32[32,32], index: 9, kind: input, shape index: {}]
  %s10 = inlined_call_operand.vmem [shape: f32[32,32], index: 10, kind: input, shape index: {}]
  %s11 = inlined_call_operand.vmem [shape: f32[64,16], index: 11, kind: input, shape index: {}]
  %s12 = inlined_call_operand.hbm [shape: f32[16,32], index: 12, kind: output, shape index: {}]
  %s13 = sld [smem:[#allocation0]]
  $region58: #{tpu_custom_call.1} parent=0
    _
  %s15 = ssub.s32 1, %s13
  %s16 = scalar_select 0, %s15, %s13
  $region1: #{tpu_custom_call.1} parent=0
    #allocation2 [shape = 'u8[8192]{0}', space=vmem, size = 0x2000, scoped, tag = 'output window, operand 0, single buffered']
    #allocation3 [shape = 's32[1]{0}', space=sflag, size = 0x4, scoped, tag = 'scoped memory for tpu_custom_call.1']
    %17 = vsyncpa [#allocation3], 0
    // Predicated region
    $region2: #{tpu_custom_call.1} parent=1 // pred_check
      _
    $region3: #{tpu_custom_call.1} parent=1 // pred_check_branch
      %19 = sbr.rel (0) target = $region5
    $region4: #{tpu_custom_call.1} parent=1 // pred_region
      _
    $region5: #{tpu_custom_call.1} parent=1 // pred_fallthru
      _
    // Predicated region
    $region6: #{tpu_custom_call.1} parent=1 // pred_check
      _
    $region7: #{tpu_custom_call.1} parent=1 // pred_check_branch
      %21 = sbr.rel (0) target = $region9
    $region8: #{tpu_custom_call.1} parent=1 // pred_region
      _
    $region9: #{tpu_custom_call.1} parent=1 // pred_fallthru
      _
    // Predicated region
    $region10: #{tpu_custom_call.1} parent=1 // pred_check
      _
    $region11: #{tpu_custom_call.1} parent=1 // pred_check_branch
      %23 = sbr.rel (0) target = $region13
    $region12: #{tpu_custom_call.1} parent=1 // pred_region
      _
    $region13: #{tpu_custom_call.1} parent=1 // pred_fallthru
      _
    // Predicated region
    $region14: #{tpu_custom_call.1} parent=1 // pred_check
      _
    $region15: #{tpu_custom_call.1} parent=1 // pred_check_branch
      %25 = sbr.rel (0) target = $region17
    $region16: #{tpu_custom_call.1} parent=1 // pred_region
      _
    $region17: #{tpu_custom_call.1} parent=1 // pred_fallthru
      _
    // Predicated region
    $region18: #{tpu_custom_call.1} parent=1 // pred_check
      _
    $region19: #{tpu_custom_call.1} parent=1 // pred_check_branch
      %27 = sbr.rel (0) target = $region21
    $region20: #{tpu_custom_call.1} parent=1 // pred_region
      _
    $region21: #{tpu_custom_call.1} parent=1 // pred_fallthru
      _
    // Predicated region
    $region22: #{tpu_custom_call.1} parent=1 // pred_check
      _
    $region23: #{tpu_custom_call.1} parent=1 // pred_check_branch
      %29 = sbr.rel (0) target = $region25
    $region24: #{tpu_custom_call.1} parent=1 // pred_region
      _
    $region25: #{tpu_custom_call.1} parent=1 // pred_fallthru
      _
    // Predicated region
    $region26: #{tpu_custom_call.1} parent=1 // pred_check
      _
    $region27: #{tpu_custom_call.1} parent=1 // pred_check_branch
      %31 = sbr.rel (0) target = $region29
    $region28: #{tpu_custom_call.1} parent=1 // pred_region
      _
    $region29: #{tpu_custom_call.1} parent=1 // pred_fallthru
      _
    // Predicated region
    $region30: #{tpu_custom_call.1} parent=1 // pred_check
      _
    $region31: #{tpu_custom_call.1} parent=1 // pred_check_branch
      %33 = sbr.rel (0) target = $region33
    $region32: #{tpu_custom_call.1} parent=1 // pred_region
      _
    $region33: #{tpu_custom_call.1} parent=1 // pred_fallthru
      _
    // Predicated region
    $region34: #{tpu_custom_call.1} parent=1 // pred_check
      _
    $region35: #{tpu_custom_call.1} parent=1 // pred_check_branch
      %35 = sbr.rel (0) target = $region37
    $region36: #{tpu_custom_call.1} parent=1 // pred_region
      _
    $region37: #{tpu_custom_call.1} parent=1 // pred_fallthru
      _
    // Predicated region
    $region38: #{tpu_custom_call.1} parent=1 // pred_check
      _
    $region39: #{tpu_custom_call.1} parent=1 // pred_check_branch
      %37 = sbr.rel (0) target = $region41
    $region40: #{tpu_custom_call.1} parent=1 // pred_region
      _
    $region41: #{tpu_custom_call.1} parent=1 // pred_fallthru
      _
    // Predicated region
    $region42: #{tpu_custom_call.1} parent=1 // pred_check
      _
    $region43: #{tpu_custom_call.1} parent=1 // pred_check_branch
      %39 = sbr.rel (0) target = $region45
    $region44: #{tpu_custom_call.1} parent=1 // pred_region
      _
    $region45: #{tpu_custom_call.1} parent=1 // pred_fallthru
      _
    // Predicated region
    $region46: #{tpu_custom_call.1} parent=1 // pred_check
      _
    $region47: #{tpu_custom_call.1} parent=1 // pred_check_branch
      %41 = sbr.rel (0) target = $region49
    $region48: #{tpu_custom_call.1} parent=1 // pred_region
      _
    $region49: #{tpu_custom_call.1} parent=1 // pred_fallthru
      _
    %v42 = vld [vmem:[%s0] sm:$0xff]
    %v43 = vld [vmem:[%s0 + $0x8] sm:$0xff]
    %v44 = vld [vmem:[%s1] sm:$0xff]
    %v45 = vld [vmem:[%s1 + $0x8] sm:$0xff]
    %v46 = vld [vmem:[%s1 + $0x10] sm:$0xff]
    %v47 = vld [vmem:[%s1 + $0x18] sm:$0xff]
    %v48 = vmul.f32 %v42, %v42
    %v49 = vmul.f32 %v43, %v43
    %vm50 = vcmask 261120
    %v51 = vsel %vm50, %v48, 0.0
    %52 = vadd.xlane.f32.xlu0 %v51
    %v53 = vpop.xlane.xlu0 %52
    %v54 = vsel %vm50, %v49, 0.0
    %55 = vadd.xlane.f32.xlu0 %v54
    %v56 = vpop.xlane.xlu0 %55
    %v57 = vrcp.pop 32.0
    %v58 = vmul.f32 %v53, %v57
    %v59 = vmul.f32 %v56, %v57
    %v60 = vadd.f32 %v58, 1e-08
    %v61 = vadd.f32 %v59, 1e-08
    %v62 = vrsqrt.pop %v60
    %v63 = vrsqrt.pop %v61
    %v64 = vld [vmem:[%s5] sm:$0x1]
    %v66 = vlaneseq
    %v67 = vshrl.u32 %v66, 7
    %v68 = vsub.s32 0, %v67
    %v69 = vrot.slane %v64, %v68
    %v71 = vmul.f32 %v69, %v62
    %v72 = vmul.f32 %v69, %v63
    %v73 = vmul.f32 %v42, %v71
    %v74 = vmul.f32 %v43, %v72
    %v75 = vmul.f32 %v44, %v44
    %v76 = vmul.f32 %v45, %v45
    %v77 = vmul.f32 %v46, %v46
    %v78 = vmul.f32 %v47, %v47
    %vm79 = vcmask 130048
    %v80 = vsel %vm79, %v75, 0.0
    %v81 = vsel %vm79, %v76, 0.0
    %v82 = vadd.f32 %v80, %v81
    %v83 = vsel %vm79, %v77, 0.0
    %v84 = vadd.f32 %v82, %v83
    %v85 = vsel %vm79, %v78, 0.0
    %v86 = vadd.f32 %v84, %v85
    %v87 = vrot.slane %v86, 4
    %v88 = vadd.f32 %v86, %v87
    %v89 = vrot.slane %v88, 2
    %v90 = vadd.f32 %v88, %v89
    %v91 = vrot.slane %v90, 1
    %v92 = vadd.f32 %v90, %v91
    %v93 = vmul.f32 %v92, %v57
    %v94 = vadd.f32 %v93, 1e-08
    %v95 = vrsqrt.pop %v94
    %v96 = vld [vmem:[%s6] sm:$0xff]
    %v97 = vld [vmem:[%s6 + $0x8] sm:$0xff]
    %v98 = vld [vmem:[%s6 + $0x10] sm:$0xff]
    %v99 = vld [vmem:[%s6 + $0x18] sm:$0xff]
    %101 = vset.pattern.permute.xlu0 0
    %102 = vperm.xlu0 %101, %v96
    %v103 = vpop.permute.xlu0 %102
    %106 = vset.pattern.permute.xlu0 0
    %107 = vperm.xlu0 %106, %v97
    %v108 = vpop.permute.xlu0 %107
    %111 = vset.pattern.permute.xlu0 0
    %112 = vperm.xlu0 %111, %v98
    %v113 = vpop.permute.xlu0 %112
    %116 = vset.pattern.permute.xlu0 0
    %117 = vperm.xlu0 %116, %v99
    %v118 = vpop.permute.xlu0 %117
    %v120 = vmul.f32 %v103, %v95
    %v121 = vmul.f32 %v108, %v95
    %v122 = vmul.f32 %v113, %v95
    %v123 = vmul.f32 %v118, %v95
    %v124 = vmul.f32 %v44, %v120
    %v125 = vmul.f32 %v45, %v121
    %v126 = vmul.f32 %v46, %v122
    %v127 = vmul.f32 %v47, %v123
    %v128 = vld [vmem:[%s3] sm:$0xff]
    %v129 = vld [vmem:[%s3 + $0x8] sm:$0xff]
    %v130 = vld [vmem:[%s3 + $0x10] sm:$0xff]
    %v131 = vld [vmem:[%s3 + $0x18] sm:$0xff]
    %v132 = vld [vmem:[%s3 + $0x20] sm:$0xff]
    %v133 = vld [vmem:[%s3 + $0x28] sm:$0xff]
    %v134 = vld [vmem:[%s3 + $0x30] sm:$0xff]
    %v135 = vld [vmem:[%s3 + $0x38] sm:$0xff]
    %v137 = vsel %vm50, %v128, 0
    %v140 = vsel %vm50, %v129, 0
    %v143 = vsel %vm50, %v130, 0
    %v146 = vsel %vm50, %v131, 0
    %v149 = vsel %vm50, %v132, 0
    %v152 = vsel %vm50, %v133, 0
    %v155 = vsel %vm50, %v134, 0
    %v158 = vsel %vm50, %v135, 0
    %160 = vmatprep.subr.mxu0 0.0
    %161 = vmatpush1.msra.mxu0 %v124
    %162 = vmatprep.subr.mxu0 0.0
    %163 = vmatpush1.msra.mxu0 %v125
    %164 = vmatprep.subr.mxu0 0.0
    %165 = vmatpush1.msra.mxu0 %v126
    %166 = vmatprep.subr.mxu0 0.0
    %167 = vmatpush1.msra.mxu0 %v127
    %168 = vmatprep.subr.mxu0 0.0
    %169 = vmatpush1.msra.mxu0 0.0
    %170 = vmatprep.subr.mxu0 0.0
    %171 = vmatpush1.msra.mxu0 0.0
    %172 = vmatprep.subr.mxu0 0.0
    %173 = vmatpush1.msra.mxu0 0.0
    %174 = vmatprep.subr.mxu0 0.0
    %175 = vmatpush1.msra.mxu0 0.0
    %176 = vmatprep.subr.mxu0 0.0
    %177 = vmatpush1.msra.mxu0 0.0
    %178 = vmatprep.subr.mxu0 0.0
    %179 = vmatpush1.msra.mxu0 0.0
    %180 = vmatprep.subr.mxu0 0.0
    %181 = vmatpush1.msra.mxu0 0.0
    %182 = vmatprep.subr.mxu0 0.0
    %183 = vmatpush1.msra.mxu0 0.0
    %184 = vmatprep.subr.mxu0 0.0
    %185 = vmatpush1.msra.mxu0 0.0
    %186 = vmatprep.subr.mxu0 0.0
    %187 = vmatpush1.msra.mxu0 0.0
    %188 = vmatprep.subr.mxu0 0.0
    %189 = vmatpush1.msra.mxu0 0.0
    %190 = vmatprep.subr.mxu0 0.0
    %191 = vmatpush1.msra.mxu0 0.0
    %192 = vmatprep.subr.mxu0 0.0
    %193 = vmatpush1.msra.mxu0 0.0
    %194 = vmatprep.subr.mxu0 0.0
    %195 = vmatpush1.msra.mxu0 0.0
    %196 = vmatprep.subr.mxu0 0.0
    %197 = vmatpush1.msra.mxu0 0.0
    %198 = vmatprep.subr.mxu0 0.0
    %199 = vmatpush1.msra.mxu0 0.0
    %200 = vmatprep.subr.mxu0 0.0
    %201 = vmatpush1.msra.mxu0 0.0
    %202 = vmatprep.subr.mxu0 0.0
    %203 = vmatpush1.msra.mxu0 0.0
    %204 = vmatprep.subr.mxu0 0.0
    %205 = vmatpush1.msra.mxu0 0.0
    %206 = vmatprep.subr.mxu0 0.0
    %207 = vmatpush1.msra.mxu0 0.0
    %208 = vmatprep.subr.mxu0 0.0
    %209 = vmatpush1.msra.mxu0 0.0
    %210 = vmatprep.subr.mxu0 0.0
    %211 = vmatpush1.msra.mxu0 0.0
    %212 = vmatprep.subr.mxu0 0.0
    %213 = vmatpush1.msra.mxu0 0.0
    %214 = vmatprep.subr.mxu0 0.0
    %215 = vmatpush1.msra.mxu0 0.0
    %216 = vmatprep.subr.mxu0 0.0
    %217 = vmatpush1.msra.mxu0 0.0
    %218 = vmatprep.subr.mxu0 0.0
    %219 = vmatpush1.msra.mxu0 0.0
    %220 = vmatprep.subr.mxu0 0.0
    %221 = vmatpush1.msra.mxu0 0.0
    %222 = vmatprep.subr.mxu0 0.0
    %223 = vmatpush1.msra.mxu0 0.0
    %224 = vmatprep.mubr.f32.mxu0 0.0
    %225 = vmatmul.mubr.f32.gmra.mrb[0].mxu0 %v137
    %v226 = vpop.f32.mrb[0].mxu0
    %v227 = vadd.f32 0.0, %v226
    %v228 = vpop.f32.mrb[0].mxu0
    %229 = vmatprep.mubr.f32.mxu0 0.0
    %230 = vmatmul.mubr.f32.gmra.mrb[0].mxu0 %v140
    %v231 = vpop.f32.mrb[0].mxu0
    %v232 = vadd.f32 0.0, %v231
    %v233 = vpop.f32.mrb[0].mxu0
    %234 = vmatprep.mubr.f32.mxu0 0.0
    %235 = vmatmul.mubr.f32.gmra.mrb[0].mxu0 %v143
    %v236 = vpop.f32.mrb[0].mxu0
    %v237 = vadd.f32 0.0, %v236
    %v238 = vpop.f32.mrb[0].mxu0
    %239 = vmatprep.mubr.f32.mxu0 0.0
    %240 = vmatmul.mubr.f32.gmra.mrb[0].mxu0 %v146
    %v241 = vpop.f32.mrb[0].mxu0
    %v242 = vadd.f32 0.0, %v241
    %v243 = vpop.f32.mrb[0].mxu0
    %244 = vmatprep.mubr.f32.mxu0 0.0
    %245 = vmatmul.mubr.f32.gmra.mrb[0].mxu0 %v149
    %v246 = vpop.f32.mrb[0].mxu0
    %v247 = vadd.f32 0.0, %v246
    %v248 = vpop.f32.mrb[0].mxu0
    %249 = vmatprep.mubr.f32.mxu0 0.0
    %250 = vmatmul.mubr.f32.gmra.mrb[0].mxu0 %v152
    %v251 = vpop.f32.mrb[0].mxu0
    %v252 = vadd.f32 0.0, %v251
    %v253 = vpop.f32.mrb[0].mxu0
    %254 = vmatprep.mubr.f32.mxu0 0.0
    %255 = vmatmul.mubr.f32.gmra.mrb[0].mxu0 %v155
    %v256 = vpop.f32.mrb[0].mxu0
    %v257 = vadd.f32 0.0, %v256
    %v258 = vpop.f32.mrb[0].mxu0
    %259 = vmatprep.mubr.f32.mxu0 0.0
    %260 = vmatmul.mubr.f32.gmra.mrb[0].mxu0 %v158
    %v261 = vpop.f32.mrb[0].mxu0
    %v262 = vadd.f32 0.0, %v261
    %v263 = vpop.f32.mrb[0].mxu0
    %264 = vdwg.mxu0
    %v265 = vld [vmem:[%s2] sm:$0xff]
    %v266 = vld [vmem:[%s2 + $0x8] sm:$0xff]
    %v267 = vld [vmem:[%s2 + $0x10] sm:$0xff]
    %v268 = vld [vmem:[%s2 + $0x18] sm:$0xff]
    %v270 = vsel %vm50, %v73, 0
    %v273 = vsel %vm50, %v74, 0
    %275 = vmatprep.subr.mxu0 0.0
    %276 = vmatpush1.msra.mxu0 %v265
    %277 = vmatprep.subr.mxu0 0.0
    %278 = vmatpush1.msra.mxu0 %v266
    %279 = vmatprep.subr.mxu0 0.0
    %280 = vmatpush1.msra.mxu0 %v267
    %281 = vmatprep.subr.mxu0 0.0
    %282 = vmatpush1.msra.mxu0 %v268
    %283 = vmatprep.subr.mxu0 0.0
    %284 = vmatpush1.msra.mxu0 0.0
    %285 = vmatprep.subr.mxu0 0.0
    %286 = vmatpush1.msra.mxu0 0.0
    %287 = vmatprep.subr.mxu0 0.0
    %288 = vmatpush1.msra.mxu0 0.0
    %289 = vmatprep.subr.mxu0 0.0
    %290 = vmatpush1.msra.mxu0 0.0
    %291 = vmatprep.subr.mxu0 0.0
    %292 = vmatpush1.msra.mxu0 0.0
    %293 = vmatprep.subr.mxu0 0.0
    %294 = vmatpush1.msra.mxu0 0.0
    %295 = vmatprep.subr.mxu0 0.0
    %296 = vmatpush1.msra.mxu0 0.0
    %297 = vmatprep.subr.mxu0 0.0
    %298 = vmatpush1.msra.mxu0 0.0
    %299 = vmatprep.subr.mxu0 0.0
    %300 = vmatpush1.msra.mxu0 0.0
    %301 = vmatprep.subr.mxu0 0.0
    %302 = vmatpush1.msra.mxu0 0.0
    %303 = vmatprep.subr.mxu0 0.0
    %304 = vmatpush1.msra.mxu0 0.0
    %305 = vmatprep.subr.mxu0 0.0
    %306 = vmatpush1.msra.mxu0 0.0
    %307 = vmatprep.subr.mxu0 0.0
    %308 = vmatpush1.msra.mxu0 0.0
    %309 = vmatprep.subr.mxu0 0.0
    %310 = vmatpush1.msra.mxu0 0.0
    %311 = vmatprep.subr.mxu0 0.0
    %312 = vmatpush1.msra.mxu0 0.0
    %313 = vmatprep.subr.mxu0 0.0
    %314 = vmatpush1.msra.mxu0 0.0
    %315 = vmatprep.subr.mxu0 0.0
    %316 = vmatpush1.msra.mxu0 0.0
    %317 = vmatprep.subr.mxu0 0.0
    %318 = vmatpush1.msra.mxu0 0.0
    %319 = vmatprep.subr.mxu0 0.0
    %320 = vmatpush1.msra.mxu0 0.0
    %321 = vmatprep.subr.mxu0 0.0
    %322 = vmatpush1.msra.mxu0 0.0
    %323 = vmatprep.subr.mxu0 0.0
    %324 = vmatpush1.msra.mxu0 0.0
    %325 = vmatprep.subr.mxu0 0.0
    %326 = vmatpush1.msra.mxu0 0.0
    %327 = vmatprep.subr.mxu0 0.0
    %328 = vmatpush1.msra.mxu0 0.0
    %329 = vmatprep.subr.mxu0 0.0
    %330 = vmatpush1.msra.mxu0 0.0
    %331 = vmatprep.subr.mxu0 0.0
    %332 = vmatpush1.msra.mxu0 0.0
    %333 = vmatprep.subr.mxu0 0.0
    %334 = vmatpush1.msra.mxu0 0.0
    %335 = vmatprep.subr.mxu0 0.0
    %336 = vmatpush1.msra.mxu0 0.0
    %337 = vmatprep.subr.mxu0 0.0
    %338 = vmatpush1.msra.mxu0 0.0
    %339 = vmatprep.mubr.f32.mxu0 0.0
    %340 = vmatmul.mubr.f32.gmra.mrb[0].mxu0 %v270
    %v341 = vpop.f32.mrb[0].mxu0
    %v342 = vadd.f32 0.0, %v341
    %v343 = vpop.f32.mrb[0].mxu0
    %344 = vmatprep.mubr.f32.mxu0 0.0
    %345 = vmatmul.mubr.f32.gmra.mrb[0].mxu0 %v273
    %v346 = vpop.f32.mrb[0].mxu0
    %v347 = vadd.f32 0.0, %v346
    %v348 = vpop.f32.mrb[0].mxu0
    %349 = vdwg.mxu0
    %vm350 = vcmask 64512
    %v352 = vsel %vm350, %v342, 0
    %v355 = vsel %vm350, %v347, 0
    %357 = vmatprep.subr.mxu0 0.0
    %358 = vmatpush1.msra.mxu0 %v227
    %359 = vmatprep.subr.mxu0 0.0
    %360 = vmatpush1.msra.mxu0 0.0
    %361 = vmatprep.subr.mxu0 0.0
    %362 = vmatpush1.msra.mxu0 0.0
    %363 = vmatprep.subr.mxu0 0.0
    %364 = vmatpush1.msra.mxu0 0.0
    %365 = vmatprep.subr.mxu0 0.0
    %366 = vmatpush1.msra.mxu0 0.0
    %367 = vmatprep.subr.mxu0 0.0
    %368 = vmatpush1.msra.mxu0 0.0
    %369 = vmatprep.subr.mxu0 0.0
    %370 = vmatpush1.msra.mxu0 0.0
    %371 = vmatprep.subr.mxu0 0.0
    %372 = vmatpush1.msra.mxu0 0.0
    %373 = vmatprep.subr.mxu0 0.0
    %374 = vmatpush1.msra.mxu0 0.0
    %375 = vmatprep.subr.mxu0 0.0
    %376 = vmatpush1.msra.mxu0 0.0
    %377 = vmatprep.subr.mxu0 0.0
    %378 = vmatpush1.msra.mxu0 0.0
    %379 = vmatprep.subr.mxu0 0.0
    %380 = vmatpush1.msra.mxu0 0.0
    %381 = vmatprep.subr.mxu0 0.0
    %382 = vmatpush1.msra.mxu0 0.0
    %383 = vmatprep.subr.mxu0 0.0
    %384 = vmatpush1.msra.mxu0 0.0
    %385 = vmatprep.subr.mxu0 0.0
    %386 = vmatpush1.msra.mxu0 0.0
    %387 = vmatprep.subr.mxu0 0.0
    %388 = vmatpush1.msra.mxu0 0.0
    %389 = vmatprep.subr.mxu0 0.0
    %390 = vmatpush1.msra.mxu0 0.0
    %391 = vmatprep.subr.mxu0 0.0
    %392 = vmatpush1.msra.mxu0 0.0
    %393 = vmatprep.subr.mxu0 0.0
    %394 = vmatpush1.msra.mxu0 0.0
    %395 = vmatprep.subr.mxu0 0.0
    %396 = vmatpush1.msra.mxu0 0.0
    %397 = vmatprep.subr.mxu0 0.0
    %398 = vmatpush1.msra.mxu0 0.0
    %399 = vmatprep.subr.mxu0 0.0
    %400 = vmatpush1.msra.mxu0 0.0
    %401 = vmatprep.subr.mxu0 0.0
    %402 = vmatpush1.msra.mxu0 0.0
    %403 = vmatprep.subr.mxu0 0.0
    %404 = vmatpush1.msra.mxu0 0.0
    %405 = vmatprep.subr.mxu0 0.0
    %406 = vmatpush1.msra.mxu0 0.0
    %407 = vmatprep.subr.mxu0 0.0
    %408 = vmatpush1.msra.mxu0 0.0
    %409 = vmatprep.subr.mxu0 0.0
    %410 = vmatpush1.msra.mxu0 0.0
    %411 = vmatprep.subr.mxu0 0.0
    %412 = vmatpush1.msra.mxu0 0.0
    %413 = vmatprep.subr.mxu0 0.0
    %414 = vmatpush1.msra.mxu0 0.0
    %415 = vmatprep.subr.mxu0 0.0
    %416 = vmatpush1.msra.mxu0 0.0
    %417 = vmatprep.subr.mxu0 0.0
    %418 = vmatpush1.msra.mxu0 0.0
    %419 = vmatprep.subr.mxu0 0.0
    %420 = vmatpush1.msra.mxu0 0.0
    %421 = vmatprep.mubr.f32.mxu0 0.0
    %422 = vmatmul.mubr.f32.gmra.mrb[0].mxu0 %v352
    %v423 = vpop.f32.mrb[0].mxu0
    %v424 = vadd.f32 0.0, %v423
    %v425 = vpop.f32.mrb[0].mxu0
    %426 = vmatprep.mubr.f32.mxu0 0.0
    %427 = vmatmul.mubr.f32.gmra.mrb[0].mxu0 %v355
    %v428 = vpop.f32.mrb[0].mxu0
    %v429 = vadd.f32 0.0, %v428
    %v430 = vpop.f32.mrb[0].mxu0
    %431 = vdwg.mxu0
    %s432 = scalar_lea.vmem %s2, 32
    %v433 = vld [vmem:[%s432] sm:$0xff]
    %v434 = vld [vmem:[%s432 + $0x8] sm:$0xff]
    %v435 = vld [vmem:[%s432 + $0x10] sm:$0xff]
    %v436 = vld [vmem:[%s432 + $0x18] sm:$0xff]
    %437 = vmatprep.subr.mxu0 0.0
    %438 = vmatpush1.msra.mxu0 %v433
    %439 = vmatprep.subr.mxu0 0.0
    %440 = vmatpush1.msra.mxu0 %v434
    %441 = vmatprep.subr.mxu0 0.0
    %442 = vmatpush1.msra.mxu0 %v435
    %443 = vmatprep.subr.mxu0 0.0
    %444 = vmatpush1.msra.mxu0 %v436
    %445 = vmatprep.subr.mxu0 0.0
    %446 = vmatpush1.msra.mxu0 0.0
    %447 = vmatprep.subr.mxu0 0.0
    %448 = vmatpush1.msra.mxu0 0.0
    %449 = vmatprep.subr.mxu0 0.0
    %450 = vmatpush1.msra.mxu0 0.0
    %451 = vmatprep.subr.mxu0 0.0
    %452 = vmatpush1.msra.mxu0 0.0
    %453 = vmatprep.subr.mxu0 0.0
    %454 = vmatpush1.msra.mxu0 0.0
    %455 = vmatprep.subr.mxu0 0.0
    %456 = vmatpush1.msra.mxu0 0.0
    %457 = vmatprep.subr.mxu0 0.0
    %458 = vmatpush1.msra.mxu0 0.0
    %459 = vmatprep.subr.mxu0 0.0
    %460 = vmatpush1.msra.mxu0 0.0
    %461 = vmatprep.subr.mxu0 0.0
    %462 = vmatpush1.msra.mxu0 0.0
    %463 = vmatprep.subr.mxu0 0.0
    %464 = vmatpush1.msra.mxu0 0.0
    %465 = vmatprep.subr.mxu0 0.0
    %466 = vmatpush1.msra.mxu0 0.0
    %467 = vmatprep.subr.mxu0 0.0
    %468 = vmatpush1.msra.mxu0 0.0
    %469 = vmatprep.subr.mxu0 0.0
    %470 = vmatpush1.msra.mxu0 0.0
    %471 = vmatprep.subr.mxu0 0.0
    %472 = vmatpush1.msra.mxu0 0.0
    %473 = vmatprep.subr.mxu0 0.0
    %474 = vmatpush1.msra.mxu0 0.0
    %475 = vmatprep.subr.mxu0 0.0
    %476 = vmatpush1.msra.mxu0 0.0
    %477 = vmatprep.subr.mxu0 0.0
    %478 = vmatpush1.msra.mxu0 0.0
    %479 = vmatprep.subr.mxu0 0.0
    %480 = vmatpush1.msra.mxu0 0.0
    %481 = vmatprep.subr.mxu0 0.0
    %482 = vmatpush1.msra.mxu0 0.0
    %483 = vmatprep.subr.mxu0 0.0
    %484 = vmatpush1.msra.mxu0 0.0
    %485 = vmatprep.subr.mxu0 0.0
    %486 = vmatpush1.msra.mxu0 0.0
    %487 = vmatprep.subr.mxu0 0.0
    %488 = vmatpush1.msra.mxu0 0.0
    %489 = vmatprep.subr.mxu0 0.0
    %490 = vmatpush1.msra.mxu0 0.0
    %491 = vmatprep.subr.mxu0 0.0
    %492 = vmatpush1.msra.mxu0 0.0
    %493 = vmatprep.subr.mxu0 0.0
    %494 = vmatpush1.msra.mxu0 0.0
    %495 = vmatprep.subr.mxu0 0.0
    %496 = vmatpush1.msra.mxu0 0.0
    %497 = vmatprep.subr.mxu0 0.0
    %498 = vmatpush1.msra.mxu0 0.0
    %499 = vmatprep.subr.mxu0 0.0
    %500 = vmatpush1.msra.mxu0 0.0
    %501 = vmatprep.mubr.f32.mxu0 0.0
    %502 = vmatmul.mubr.f32.gmra.mrb[0].mxu0 %v270
    %v503 = vpop.f32.mrb[0].mxu0
    %v504 = vadd.f32 0.0, %v503
    %v505 = vpop.f32.mrb[0].mxu0
    %506 = vmatprep.mubr.f32.mxu0 0.0
    %507 = vmatmul.mubr.f32.gmra.mrb[0].mxu0 %v273
    %v508 = vpop.f32.mrb[0].mxu0
    %v509 = vadd.f32 0.0, %v508
    %v510 = vpop.f32.mrb[0].mxu0
    %511 = vdwg.mxu0
    %v513 = vsel %vm350, %v504, 0
    %v516 = vsel %vm350, %v509, 0
    %518 = vmatprep.subr.mxu0 0.0
    %519 = vmatpush1.msra.mxu0 %v232
    %520 = vmatprep.subr.mxu0 0.0
    %521 = vmatpush1.msra.mxu0 0.0
    %522 = vmatprep.subr.mxu0 0.0
    %523 = vmatpush1.msra.mxu0 0.0
    %524 = vmatprep.subr.mxu0 0.0
    %525 = vmatpush1.msra.mxu0 0.0
    %526 = vmatprep.subr.mxu0 0.0
    %527 = vmatpush1.msra.mxu0 0.0
    %528 = vmatprep.subr.mxu0 0.0
    %529 = vmatpush1.msra.mxu0 0.0
    %530 = vmatprep.subr.mxu0 0.0
    %531 = vmatpush1.msra.mxu0 0.0
    %532 = vmatprep.subr.mxu0 0.0
    %533 = vmatpush1.msra.mxu0 0.0
    %534 = vmatprep.subr.mxu0 0.0
    %535 = vmatpush1.msra.mxu0 0.0
    %536 = vmatprep.subr.mxu0 0.0
    %537 = vmatpush1.msra.mxu0 0.0
    %538 = vmatprep.subr.mxu0 0.0
    %539 = vmatpush1.msra.mxu0 0.0
    %540 = vmatprep.subr.mxu0 0.0
    %541 = vmatpush1.msra.mxu0 0.0
    %542 = vmatprep.subr.mxu0 0.0
    %543 = vmatpush1.msra.mxu0 0.0
    %544 = vmatprep.subr.mxu0 0.0
    %545 = vmatpush1.msra.mxu0 0.0
    %546 = vmatprep.subr.mxu0 0.0
    %547 = vmatpush1.msra.mxu0 0.0
    %548 = vmatprep.subr.mxu0 0.0
    %549 = vmatpush1.msra.mxu0 0.0
    %550 = vmatprep.subr.mxu0 0.0
    %551 = vmatpush1.msra.mxu0 0.0
    %552 = vmatprep.subr.mxu0 0.0
    %553 = vmatpush1.msra.mxu0 0.0
    %554 = vmatprep.subr.mxu0 0.0
    %555 = vmatpush1.msra.mxu0 0.0
    %556 = vmatprep.subr.mxu0 0.0
    %557 = vmatpush1.msra.mxu0 0.0
    %558 = vmatprep.subr.mxu0 0.0
    %559 = vmatpush1.msra.mxu0 0.0
    %560 = vmatprep.subr.mxu0 0.0
    %561 = vmatpush1.msra.mxu0 0.0
    %562 = vmatprep.subr.mxu0 0.0
    %563 = vmatpush1.msra.mxu0 0.0
    %564 = vmatprep.subr.mxu0 0.0
    %565 = vmatpush1.msra.mxu0 0.0
    %566 = vmatprep.subr.mxu0 0.0
    %567 = vmatpush1.msra.mxu0 0.0
    %568 = vmatprep.subr.mxu0 0.0
    %569 = vmatpush1.msra.mxu0 0.0
    %570 = vmatprep.subr.mxu0 0.0
    %571 = vmatpush1.msra.mxu0 0.0
    %572 = vmatprep.subr.mxu0 0.0
    %573 = vmatpush1.msra.mxu0 0.0
    %574 = vmatprep.subr.mxu0 0.0
    %575 = vmatpush1.msra.mxu0 0.0
    %576 = vmatprep.subr.mxu0 0.0
    %577 = vmatpush1.msra.mxu0 0.0
    %578 = vmatprep.subr.mxu0 0.0
    %579 = vmatpush1.msra.mxu0 0.0
    %580 = vmatprep.subr.mxu0 0.0
    %581 = vmatpush1.msra.mxu0 0.0
    %582 = vmatprep.mubr.f32.mxu0 0.0
    %583 = vmatmul.mubr.f32.gmra.mrb[0].mxu0 %v513
    %v584 = vpop.f32.mrb[0].mxu0
    %v585 = vadd.f32 0.0, %v584
    %v586 = vpop.f32.mrb[0].mxu0
    %587 = vmatprep.mubr.f32.mxu0 0.0
    %588 = vmatmul.mubr.f32.gmra.mrb[0].mxu0 %v516
    %v589 = vpop.f32.mrb[0].mxu0
    %v590 = vadd.f32 0.0, %v589
    %v591 = vpop.f32.mrb[0].mxu0
    %592 = vdwg.mxu0
    %s593 = scalar_lea.vmem %s2, 64
    %v594 = vld [vmem:[%s593] sm:$0xff]
    %v595 = vld [vmem:[%s593 + $0x8] sm:$0xff]
    %v596 = vld [vmem:[%s593 + $0x10] sm:$0xff]
    %v597 = vld [vmem:[%s593 + $0x18] sm:$0xff]
    %598 = vmatprep.subr.mxu0 0.0
    %599 = vmatpush1.msra.mxu0 %v594
    %600 = vmatprep.subr.mxu0 0.0
    %601 = vmatpush1.msra.mxu0 %v595
    %602 = vmatprep.subr.mxu0 0.0
    %603 = vmatpush1.msra.mxu0 %v596
    %604 = vmatprep.subr.mxu0 0.0
    %605 = vmatpush1.msra.mxu0 %v597
    %606 = vmatprep.subr.mxu0 0.0
    %607 = vmatpush1.msra.mxu0 0.0
    %608 = vmatprep.subr.mxu0 0.0
    %609 = vmatpush1.msra.mxu0 0.0
    %610 = vmatprep.subr.mxu0 0.0
    %611 = vmatpush1.msra.mxu0 0.0
    %612 = vmatprep.subr.mxu0 0.0
    %613 = vmatpush1.msra.mxu0 0.0
    %614 = vmatprep.subr.mxu0 0.0
    %615 = vmatpush1.msra.mxu0 0.0
    %616 = vmatprep.subr.mxu0 0.0
    %617 = vmatpush1.msra.mxu0 0.0
    %618 = vmatprep.subr.mxu0 0.0
    %619 = vmatpush1.msra.mxu0 0.0
    %620 = vmatprep.subr.mxu0 0.0
    %621 = vmatpush1.msra.mxu0 0.0
    %622 = vmatprep.subr.mxu0 0.0
    %623 = vmatpush1.msra.mxu0 0.0
    %624 = vmatprep.subr.mxu0 0.0
    %625 = vmatpush1.msra.mxu0 0.0
    %626 = vmatprep.subr.mxu0 0.0
    %627 = vmatpush1.msra.mxu0 0.0
    %628 = vmatprep.subr.mxu0 0.0
    %629 = vmatpush1.msra.mxu0 0.0
    %630 = vmatprep.subr.mxu0 0.0
    %631 = vmatpush1.msra.mxu0 0.0
    %632 = vmatprep.subr.mxu0 0.0
    %633 = vmatpush1.msra.mxu0 0.0
    %634 = vmatprep.subr.mxu0 0.0
    %635 = vmatpush1.msra.mxu0 0.0
    %636 = vmatprep.subr.mxu0 0.0
    %637 = vmatpush1.msra.mxu0 0.0
    %638 = vmatprep.subr.mxu0 0.0
    %639 = vmatpush1.msra.mxu0 0.0
    %640 = vmatprep.subr.mxu0 0.0
    %641 = vmatpush1.msra.mxu0 0.0
    %642 = vmatprep.subr.mxu0 0.0
    %643 = vmatpush1.msra.mxu0 0.0
    %644 = vmatprep.subr.mxu0 0.0
    %645 = vmatpush1.msra.mxu0 0.0
    %646 = vmatprep.subr.mxu0 0.0
    %647 = vmatpush1.msra.mxu0 0.0
    %648 = vmatprep.subr.mxu0 0.0
    %649 = vmatpush1.msra.mxu0 0.0
    %650 = vmatprep.subr.mxu0 0.0
    %651 = vmatpush1.msra.mxu0 0.0
    %652 = vmatprep.subr.mxu0 0.0
    %653 = vmatpush1.msra.mxu0 0.0
    %654 = vmatprep.subr.mxu0 0.0
    %655 = vmatpush1.msra.mxu0 0.0
    %656 = vmatprep.subr.mxu0 0.0
    %657 = vmatpush1.msra.mxu0 0.0
    %658 = vmatprep.subr.mxu0 0.0
    %659 = vmatpush1.msra.mxu0 0.0
    %660 = vmatprep.subr.mxu0 0.0
    %661 = vmatpush1.msra.mxu0 0.0
    %662 = vmatprep.mubr.f32.mxu0 0.0
    %663 = vmatmul.mubr.f32.gmra.mrb[0].mxu0 %v270
    %v664 = vpop.f32.mrb[0].mxu0
    %v665 = vadd.f32 0.0, %v664
    %v666 = vpop.f32.mrb[0].mxu0
    %667 = vmatprep.mubr.f32.mxu0 0.0
    %668 = vmatmul.mubr.f32.gmra.mrb[0].mxu0 %v273
    %v669 = vpop.f32.mrb[0].mxu0
    %v670 = vadd.f32 0.0, %v669
    %v671 = vpop.f32.mrb[0].mxu0
    %672 = vdwg.mxu0
    %v674 = vsel %vm350, %v665, 0
    %v677 = vsel %vm350, %v670, 0
    %679 = vmatprep.subr.mxu0 0.0
    %680 = vmatpush1.msra.mxu0 %v237
    %681 = vmatprep.subr.mxu0 0.0
    %682 = vmatpush1.msra.mxu0 0.0
    %683 = vmatprep.subr.mxu0 0.0
    %684 = vmatpush1.msra.mxu0 0.0
    %685 = vmatprep.subr.mxu0 0.0
    %686 = vmatpush1.msra.mxu0 0.0
    %687 = vmatprep.subr.mxu0 0.0
    %688 = vmatpush1.msra.mxu0 0.0
    %689 = vmatprep.subr.mxu0 0.0
    %690 = vmatpush1.msra.mxu0 0.0
    %691 = vmatprep.subr.mxu0 0.0
    %692 = vmatpush1.msra.mxu0 0.0
    %693 = vmatprep.subr.mxu0 0.0
    %694 = vmatpush1.msra.mxu0 0.0
    %695 = vmatprep.subr.mxu0 0.0
    %696 = vmatpush1.msra.mxu0 0.0
    %697 = vmatprep.subr.mxu0 0.0
    %698 = vmatpush1.msra.mxu0 0.0
    %699 = vmatprep.subr.mxu0 0.0
    %700 = vmatpush1.msra.mxu0 0.0
    %701 = vmatprep.subr.mxu0 0.0
    %702 = vmatpush1.msra.mxu0 0.0
    %703 = vmatprep.subr.mxu0 0.0
    %704 = vmatpush1.msra.mxu0 0.0
    %705 = vmatprep.subr.mxu0 0.0
    %706 = vmatpush1.msra.mxu0 0.0
    %707 = vmatprep.subr.mxu0 0.0
    %708 = vmatpush1.msra.mxu0 0.0
    %709 = vmatprep.subr.mxu0 0.0
    %710 = vmatpush1.msra.mxu0 0.0
    %711 = vmatprep.subr.mxu0 0.0
    %712 = vmatpush1.msra.mxu0 0.0
    %713 = vmatprep.subr.mxu0 0.0
    %714 = vmatpush1.msra.mxu0 0.0
    %715 = vmatprep.subr.mxu0 0.0
    %716 = vmatpush1.msra.mxu0 0.0
    %717 = vmatprep.subr.mxu0 0.0
    %718 = vmatpush1.msra.mxu0 0.0
    %719 = vmatprep.subr.mxu0 0.0
    %720 = vmatpush1.msra.mxu0 0.0
    %721 = vmatprep.subr.mxu0 0.0
    %722 = vmatpush1.msra.mxu0 0.0
    %723 = vmatprep.subr.mxu0 0.0
    %724 = vmatpush1.msra.mxu0 0.0
    %725 = vmatprep.subr.mxu0 0.0
    %726 = vmatpush1.msra.mxu0 0.0
    %727 = vmatprep.subr.mxu0 0.0
    %728 = vmatpush1.msra.mxu0 0.0
    %729 = vmatprep.subr.mxu0 0.0
    %730 = vmatpush1.msra.mxu0 0.0
    %731 = vmatprep.subr.mxu0 0.0
    %732 = vmatpush1.msra.mxu0 0.0
    %733 = vmatprep.subr.mxu0 0.0
    %734 = vmatpush1.msra.mxu0 0.0
    %735 = vmatprep.subr.mxu0 0.0
    %736 = vmatpush1.msra.mxu0 0.0
    %737 = vmatprep.subr.mxu0 0.0
    %738 = vmatpush1.msra.mxu0 0.0
    %739 = vmatprep.subr.mxu0 0.0
    %740 = vmatpush1.msra.mxu0 0.0
    %741 = vmatprep.subr.mxu0 0.0
    %742 = vmatpush1.msra.mxu0 0.0
    %743 = vmatprep.mubr.f32.mxu0 0.0
    %744 = vmatmul.mubr.f32.gmra.mrb[0].mxu0 %v674
    %v745 = vpop.f32.mrb[0].mxu0
    %v746 = vadd.f32 0.0, %v745
    %v747 = vpop.f32.mrb[0].mxu0
    %748 = vmatprep.mubr.f32.mxu0 0.0
    %749 = vmatmul.mubr.f32.gmra.mrb[0].mxu0 %v677
    %v750 = vpop.f32.mrb[0].mxu0
    %v751 = vadd.f32 0.0, %v750
    %v752 = vpop.f32.mrb[0].mxu0
    %753 = vdwg.mxu0
    %s754 = scalar_lea.vmem %s2, 96
    %v755 = vld [vmem:[%s754] sm:$0xff]
    %v756 = vld [vmem:[%s754 + $0x8] sm:$0xff]
    %v757 = vld [vmem:[%s754 + $0x10] sm:$0xff]
    %v758 = vld [vmem:[%s754 + $0x18] sm:$0xff]
    %759 = vmatprep.subr.mxu0 0.0
    %760 = vmatpush1.msra.mxu0 %v755
    %761 = vmatprep.subr.mxu0 0.0
    %762 = vmatpush1.msra.mxu0 %v756
    %763 = vmatprep.subr.mxu0 0.0
    %764 = vmatpush1.msra.mxu0 %v757
    %765 = vmatprep.subr.mxu0 0.0
    %766 = vmatpush1.msra.mxu0 %v758
    %767 = vmatprep.subr.mxu0 0.0
    %768 = vmatpush1.msra.mxu0 0.0
    %769 = vmatprep.subr.mxu0 0.0
    %770 = vmatpush1.msra.mxu0 0.0
    %771 = vmatprep.subr.mxu0 0.0
    %772 = vmatpush1.msra.mxu0 0.0
    %773 = vmatprep.subr.mxu0 0.0
    %774 = vmatpush1.msra.mxu0 0.0
    %775 = vmatprep.subr.mxu0 0.0
    %776 = vmatpush1.msra.mxu0 0.0
    %777 = vmatprep.subr.mxu0 0.0
    %778 = vmatpush1.msra.mxu0 0.0
    %779 = vmatprep.subr.mxu0 0.0
    %780 = vmatpush1.msra.mxu0 0.0
    %781 = vmatprep.subr.mxu0 0.0
    %782 = vmatpush1.msra.mxu0 0.0
    %783 = vmatprep.subr.mxu0 0.0
    %784 = vmatpush1.msra.mxu0 0.0
    %785 = vmatprep.subr.mxu0 0.0
    %786 = vmatpush1.msra.mxu0 0.0
    %787 = vmatprep.subr.mxu0 0.0
    %788 = vmatpush1.msra.mxu0 0.0
    %789 = vmatprep.subr.mxu0 0.0
    %790 = vmatpush1.msra.mxu0 0.0
    %791 = vmatprep.subr.mxu0 0.0
    %792 = vmatpush1.msra.mxu0 0.0
    %793 = vmatprep.subr.mxu0 0.0
    %794 = vmatpush1.msra.mxu0 0.0
    %795 = vmatprep.subr.mxu0 0.0
    %796 = vmatpush1.msra.mxu0 0.0
    %797 = vmatprep.subr.mxu0 0.0
    %798 = vmatpush1.msra.mxu0 0.0
    %799 = vmatprep.subr.mxu0 0.0
    %800 = vmatpush1.msra.mxu0 0.0
    %801 = vmatprep.subr.mxu0 0.0
    %802 = vmatpush1.msra.mxu0 0.0
    %803 = vmatprep.subr.mxu0 0.0
    %804 = vmatpush1.msra.mxu0 0.0
    %805 = vmatprep.subr.mxu0 0.0
    %806 = vmatpush1.msra.mxu0 0.0
    %807 = vmatprep.subr.mxu0 0.0
    %808 = vmatpush1.msra.mxu0 0.0
    %809 = vmatprep.subr.mxu0 0.0
    %810 = vmatpush1.msra.mxu0 0.0
    %811 = vmatprep.subr.mxu0 0.0
    %812 = vmatpush1.msra.mxu0 0.0
    %813 = vmatprep.subr.mxu0 0.0
    %814 = vmatpush1.msra.mxu0 0.0
    %815 = vmatprep.subr.mxu0 0.0
    %816 = vmatpush1.msra.mxu0 0.0
    %817 = vmatprep.subr.mxu0 0.0
    %818 = vmatpush1.msra.mxu0 0.0
    %819 = vmatprep.subr.mxu0 0.0
    %820 = vmatpush1.msra.mxu0 0.0
    %821 = vmatprep.subr.mxu0 0.0
    %822 = vmatpush1.msra.mxu0 0.0
    %823 = vmatprep.mubr.f32.mxu0 0.0
    %824 = vmatmul.mubr.f32.gmra.mrb[0].mxu0 %v270
    %v825 = vpop.f32.mrb[0].mxu0
    %v826 = vadd.f32 0.0, %v825
    %v827 = vpop.f32.mrb[0].mxu0
    %828 = vmatprep.mubr.f32.mxu0 0.0
    %829 = vmatmul.mubr.f32.gmra.mrb[0].mxu0 %v273
    %v830 = vpop.f32.mrb[0].mxu0
    %v831 = vadd.f32 0.0, %v830
    %v832 = vpop.f32.mrb[0].mxu0
    %833 = vdwg.mxu0
    %v835 = vsel %vm350, %v826, 0
    %v838 = vsel %vm350, %v831, 0
    %840 = vmatprep.subr.mxu0 0.0
    %841 = vmatpush1.msra.mxu0 %v242
    %842 = vmatprep.subr.mxu0 0.0
    %843 = vmatpush1.msra.mxu0 0.0
    %844 = vmatprep.subr.mxu0 0.0
    %845 = vmatpush1.msra.mxu0 0.0
    %846 = vmatprep.subr.mxu0 0.0
    %847 = vmatpush1.msra.mxu0 0.0
    %848 = vmatprep.subr.mxu0 0.0
    %849 = vmatpush1.msra.mxu0 0.0
    %850 = vmatprep.subr.mxu0 0.0
    %851 = vmatpush1.msra.mxu0 0.0
    %852 = vmatprep.subr.mxu0 0.0
    %853 = vmatpush1.msra.mxu0 0.0
    %854 = vmatprep.subr.mxu0 0.0
    %855 = vmatpush1.msra.mxu0 0.0
    %856 = vmatprep.subr.mxu0 0.0
    %857 = vmatpush1.msra.mxu0 0.0
    %858 = vmatprep.subr.mxu0 0.0
    %859 = vmatpush1.msra.mxu0 0.0
    %860 = vmatprep.subr.mxu0 0.0
    %861 = vmatpush1.msra.mxu0 0.0
    %862 = vmatprep.subr.mxu0 0.0
    %863 = vmatpush1.msra.mxu0 0.0
    %864 = vmatprep.subr.mxu0 0.0
    %865 = vmatpush1.msra.mxu0 0.0
    %866 = vmatprep.subr.mxu0 0.0
    %867 = vmatpush1.msra.mxu0 0.0
    %868 = vmatprep.subr.mxu0 0.0
    %869 = vmatpush1.msra.mxu0 0.0
    %870 = vmatprep.subr.mxu0 0.0
    %871 = vmatpush1.msra.mxu0 0.0
    %872 = vmatprep.subr.mxu0 0.0
    %873 = vmatpush1.msra.mxu0 0.0
    %874 = vmatprep.subr.mxu0 0.0
    %875 = vmatpush1.msra.mxu0 0.0
    %876 = vmatprep.subr.mxu0 0.0
    %877 = vmatpush1.msra.mxu0 0.0
    %878 = vmatprep.subr.mxu0 0.0
    %879 = vmatpush1.msra.mxu0 0.0
    %880 = vmatprep.subr.mxu0 0.0
    %881 = vmatpush1.msra.mxu0 0.0
    %882 = vmatprep.subr.mxu0 0.0
    %883 = vmatpush1.msra.mxu0 0.0
    %884 = vmatprep.subr.mxu0 0.0
    %885 = vmatpush1.msra.mxu0 0.0
    %886 = vmatprep.subr.mxu0 0.0
    %887 = vmatpush1.msra.mxu0 0.0
    %888 = vmatprep.subr.mxu0 0.0
    %889 = vmatpush1.msra.mxu0 0.0
    %890 = vmatprep.subr.mxu0 0.0
    %891 = vmatpush1.msra.mxu0 0.0
    %892 = vmatprep.subr.mxu0 0.0
    %893 = vmatpush1.msra.mxu0 0.0
    %894 = vmatprep.subr.mxu0 0.0
    %895 = vmatpush1.msra.mxu0 0.0
    %896 = vmatprep.subr.mxu0 0.0
    %897 = vmatpush1.msra.mxu0 0.0
    %898 = vmatprep.subr.mxu0 0.0
    %899 = vmatpush1.msra.mxu0 0.0
    %900 = vmatprep.subr.mxu0 0.0
    %901 = vmatpush1.msra.mxu0 0.0
    %902 = vmatprep.subr.mxu0 0.0
    %903 = vmatpush1.msra.mxu0 0.0
    %904 = vmatprep.mubr.f32.mxu0 0.0
    %905 = vmatmul.mubr.f32.gmra.mrb[0].mxu0 %v835
    %v906 = vpop.f32.mrb[0].mxu0
    %v907 = vadd.f32 0.0, %v906
    %v908 = vpop.f32.mrb[0].mxu0
    %909 = vmatprep.mubr.f32.mxu0 0.0
    %910 = vmatmul.mubr.f32.gmra.mrb[0].mxu0 %v838
    %v911 = vpop.f32.mrb[0].mxu0
    %v912 = vadd.f32 0.0, %v911
    %v913 = vpop.f32.mrb[0].mxu0
    %914 = vdwg.mxu0
    %v915 = vld [vmem:[%s11] sm:$0xff]
    %v916 = vld [vmem:[%s11 + $0x8] sm:$0xff]
    %v917 = vld [vmem:[%s11 + $0x10] sm:$0xff]
    %v918 = vld [vmem:[%s11 + $0x18] sm:$0xff]
    %v919 = vld [vmem:[%s11 + $0x20] sm:$0xff]
    %v920 = vld [vmem:[%s11 + $0x28] sm:$0xff]
    %v921 = vld [vmem:[%s11 + $0x30] sm:$0xff]
    %v922 = vld [vmem:[%s11 + $0x38] sm:$0xff]
    %v923 = vadd.f32 %v424, %v915
    %v924 = vadd.f32 %v429, %v916
    %v925 = vadd.f32 %v585, %v917
    %v926 = vadd.f32 %v590, %v918
    %v927 = vadd.f32 %v746, %v919
    %v928 = vadd.f32 %v751, %v920
    %v929 = vadd.f32 %v907, %v921
    %v930 = vadd.f32 %v912, %v922
    %v931 = vsel %vm79, %v923, -inf
    %932 = vmax.xlane.f32.xlu0 %v931
    %v933 = vpop.xlane.xlu0 %932
    %v934 = vsel %vm79, %v924, -inf
    %935 = vmax.xlane.f32.xlu0 %v934
    %v936 = vpop.xlane.xlu0 %935
    %v937 = vsel %vm79, %v925, -inf
    %938 = vmax.xlane.f32.xlu0 %v937
    %v939 = vpop.xlane.xlu0 %938
    %v940 = vsel %vm79, %v926, -inf
    %941 = vmax.xlane.f32.xlu0 %v940
    %v942 = vpop.xlane.xlu0 %941
    %v943 = vsel %vm79, %v927, -inf
    %944 = vmax.xlane.f32.xlu0 %v943
    %v945 = vpop.xlane.xlu0 %944
    %v946 = vsel %vm79, %v928, -inf
    %947 = vmax.xlane.f32.xlu0 %v946
    %v948 = vpop.xlane.xlu0 %947
    %v949 = vsel %vm79, %v929, -inf
    %950 = vmax.xlane.f32.xlu0 %v949
    %v951 = vpop.xlane.xlu0 %950
    %v952 = vsel %vm79, %v930, -inf
    %953 = vmax.xlane.f32.xlu0 %v952
    %v954 = vpop.xlane.xlu0 %953
    %v955 = vsub.f32 %v923, %v933
    %v956 = vsub.f32 %v924, %v936
    %v957 = vsub.f32 %v925, %v939
    %v958 = vsub.f32 %v926, %v942
    %v959 = vsub.f32 %v927, %v945
    %v960 = vsub.f32 %v928, %v948
    %v961 = vsub.f32 %v929, %v951
    %v962 = vsub.f32 %v930, %v954
    %v963 = vmul.f32 %v955, 1.442695
    %v964 = vpow.pop %v963
    %v965 = vmul.f32 %v956, 1.442695
    %v966 = vpow.pop %v965
    %v967 = vmul.f32 %v957, 1.442695
    %v968 = vpow.pop %v967
    %v969 = vmul.f32 %v958, 1.442695
    %v970 = vpow.pop %v969
    %v971 = vmul.f32 %v959, 1.442695
    %v972 = vpow.pop %v971
    %v973 = vmul.f32 %v960, 1.442695
    %v974 = vpow.pop %v973
    %v975 = vmul.f32 %v961, 1.442695
    %v976 = vpow.pop %v975
    %v977 = vmul.f32 %v962, 1.442695
    %v978 = vpow.pop %v977
    %v979 = vsel %vm79, %v964, 0.0
    %980 = vadd.xlane.f32.xlu0 %v979
    %v981 = vpop.xlane.xlu0 %980
    %v982 = vsel %vm79, %v966, 0.0
    %983 = vadd.xlane.f32.xlu0 %v982
    %v984 = vpop.xlane.xlu0 %983
    %v985 = vsel %vm79, %v968, 0.0
    %986 = vadd.xlane.f32.xlu0 %v985
    %v987 = vpop.xlane.xlu0 %986
    %v988 = vsel %vm79, %v970, 0.0
    %989 = vadd.xlane.f32.xlu0 %v988
    %v990 = vpop.xlane.xlu0 %989
    %v991 = vsel %vm79, %v972, 0.0
    %992 = vadd.xlane.f32.xlu0 %v991
    %v993 = vpop.xlane.xlu0 %992
    %v994 = vsel %vm79, %v974, 0.0
    %995 = vadd.xlane.f32.xlu0 %v994
    %v996 = vpop.xlane.xlu0 %995
    %v997 = vsel %vm79, %v976, 0.0
    %998 = vadd.xlane.f32.xlu0 %v997
    %v999 = vpop.xlane.xlu0 %998
    %v1000 = vsel %vm79, %v978, 0.0
    %1001 = vadd.xlane.f32.xlu0 %v1000
    %v1002 = vpop.xlane.xlu0 %1001
    %v1003 = vrcp.pop %v981
    %v1004 = vrcp.pop %v984
    %v1005 = vrcp.pop %v987
    %v1006 = vrcp.pop %v990
    %v1007 = vrcp.pop %v993
    %v1008 = vrcp.pop %v996
    %v1009 = vrcp.pop %v999
    %v1010 = vrcp.pop %v1002
    %v1011 = vmul.f32 %v964, %v1003
    %v1012 = vmul.f32 %v966, %v1004
    %v1013 = vmul.f32 %v968, %v1005
    %v1014 = vmul.f32 %v970, %v1006
    %v1015 = vmul.f32 %v972, %v1007
    %v1016 = vmul.f32 %v974, %v1008
    %v1017 = vmul.f32 %v976, %v1009
    %v1018 = vmul.f32 %v978, %v1010
    %v1020 = vsel %vm79, %v1011, 0
    %v1023 = vsel %vm79, %v1012, 0
    %v1026 = vsel %vm79, %v247, 0
    %1028 = vmatprep.subr.mxu0 0.0
    %1029 = vmatpush1.xpose.msra.mxu0 %v1026
    %1030 = vmatprep.subr.mxu0 0.0
    %1031 = vmatpush1.xpose.msra.mxu0 0.0
    %1032 = vmatprep.subr.mxu0 0.0
    %1033 = vmatpush1.xpose.msra.mxu0 0.0
    %1034 = vmatprep.subr.mxu0 0.0
    %1035 = vmatpush1.xpose.msra.mxu0 0.0
    %1036 = vmatprep.subr.mxu0 0.0
    %1037 = vmatpush1.xpose.msra.mxu0 0.0
    %1038 = vmatprep.subr.mxu0 0.0
    %1039 = vmatpush1.xpose.msra.mxu0 0.0
    %1040 = vmatprep.subr.mxu0 0.0
    %1041 = vmatpush1.xpose.msra.mxu0 0.0
    %1042 = vmatprep.subr.mxu0 0.0
    %1043 = vmatpush1.xpose.msra.mxu0 0.0
    %1044 = vmatprep.subr.mxu0 0.0
    %1045 = vmatpush1.xpose.msra.mxu0 0.0
    %1046 = vmatprep.subr.mxu0 0.0
    %1047 = vmatpush1.xpose.msra.mxu0 0.0
    %1048 = vmatprep.subr.mxu0 0.0
    %1049 = vmatpush1.xpose.msra.mxu0 0.0
    %1050 = vmatprep.subr.mxu0 0.0
    %1051 = vmatpush1.xpose.msra.mxu0 0.0
    %1052 = vmatprep.subr.mxu0 0.0
    %1053 = vmatpush1.xpose.msra.mxu0 0.0
    %1054 = vmatprep.subr.mxu0 0.0
    %1055 = vmatpush1.xpose.msra.mxu0 0.0
    %1056 = vmatprep.subr.mxu0 0.0
    %1057 = vmatpush1.xpose.msra.mxu0 0.0
    %1058 = vmatprep.subr.mxu0 0.0
    %1059 = vmatpush1.xpose.msra.mxu0 0.0
    %1060 = vmatprep.subr.mxu0 0.0
    %1061 = vmatpush1.xpose.msra.mxu0 0.0
    %1062 = vmatprep.subr.mxu0 0.0
    %1063 = vmatpush1.xpose.msra.mxu0 0.0
    %1064 = vmatprep.subr.mxu0 0.0
    %1065 = vmatpush1.xpose.msra.mxu0 0.0
    %1066 = vmatprep.subr.mxu0 0.0
    %1067 = vmatpush1.xpose.msra.mxu0 0.0
    %1068 = vmatprep.subr.mxu0 0.0
    %1069 = vmatpush1.xpose.msra.mxu0 0.0
    %1070 = vmatprep.subr.mxu0 0.0
    %1071 = vmatpush1.xpose.msra.mxu0 0.0
    %1072 = vmatprep.subr.mxu0 0.0
    %1073 = vmatpush1.xpose.msra.mxu0 0.0
    %1074 = vmatprep.subr.mxu0 0.0
    %1075 = vmatpush1.xpose.msra.mxu0 0.0
    %1076 = vmatprep.subr.mxu0 0.0
    %1077 = vmatpush1.xpose.msra.mxu0 0.0
    %1078 = vmatprep.subr.mxu0 0.0
    %1079 = vmatpush1.xpose.msra.mxu0 0.0
    %1080 = vmatprep.subr.mxu0 0.0
    %1081 = vmatpush1.xpose.msra.mxu0 0.0
    %1082 = vmatprep.subr.mxu0 0.0
    %1083 = vmatpush1.xpose.msra.mxu0 0.0
    %1084 = vmatprep.subr.mxu0 0.0
    %1085 = vmatpush1.xpose.msra.mxu0 0.0
    %1086 = vmatprep.subr.mxu0 0.0
    %1087 = vmatpush1.xpose.msra.mxu0 0.0
    %1088 = vmatprep.subr.mxu0 0.0
    %1089 = vmatpush1.xpose.msra.mxu0 0.0
    %1090 = vmatprep.subr.mxu0 0.0
    %1091 = vmatpush1.xpose.msra.mxu0 0.0
    %1092 = vmatprep.mubr.f32.mxu0 0.0
    %1093 = vmatmul.mubr.f32.gmra.mrb[0].mxu0 %v1020
    %v1094 = vpop.f32.mrb[0].mxu0
    %v1095 = vadd.f32 0.0, %v1094
    %v1096 = vpop.f32.mrb[0].mxu0
    %1097 = vmatprep.mubr.f32.mxu0 0.0
    %1098 = vmatmul.mubr.f32.gmra.mrb[0].mxu0 %v1023
    %v1099 = vpop.f32.mrb[0].mxu0
    %v1100 = vadd.f32 0.0, %v1099
    %v1101 = vpop.f32.mrb[0].mxu0
    %1102 = vdwg.mxu0
    %v1103 = vld [vmem:[%s4] sm:$0xff]
    %v1105 = vsel %vm350, %v1095, 0
    %v1108 = vsel %vm350, %v1100, 0
    %1110 = vmatprep.subr.mxu0 0.0
    %1111 = vmatpush1.msra.mxu0 %v1103
    %1112 = vmatprep.subr.mxu0 0.0
    %1113 = vmatpush1.msra.mxu0 0.0
    %1114 = vmatprep.subr.mxu0 0.0
    %1115 = vmatpush1.msra.mxu0 0.0
    %1116 = vmatprep.subr.mxu0 0.0
    %1117 = vmatpush1.msra.mxu0 0.0
    %1118 = vmatprep.subr.mxu0 0.0
    %1119 = vmatpush1.msra.mxu0 0.0
    %1120 = vmatprep.subr.mxu0 0.0
    %1121 = vmatpush1.msra.mxu0 0.0
    %1122 = vmatprep.subr.mxu0 0.0
    %1123 = vmatpush1.msra.mxu0 0.0
    %1124 = vmatprep.subr.mxu0 0.0
    %1125 = vmatpush1.msra.mxu0 0.0
    %1126 = vmatprep.subr.mxu0 0.0
    %1127 = vmatpush1.msra.mxu0 0.0
    %1128 = vmatprep.subr.mxu0 0.0
    %1129 = vmatpush1.msra.mxu0 0.0
    %1130 = vmatprep.subr.mxu0 0.0
    %1131 = vmatpush1.msra.mxu0 0.0
    %1132 = vmatprep.subr.mxu0 0.0
    %1133 = vmatpush1.msra.mxu0 0.0
    %1134 = vmatprep.subr.mxu0 0.0
    %1135 = vmatpush1.msra.mxu0 0.0
    %1136 = vmatprep.subr.mxu0 0.0
    %1137 = vmatpush1.msra.mxu0 0.0
    %1138 = vmatprep.subr.mxu0 0.0
    %1139 = vmatpush1.msra.mxu0 0.0
    %1140 = vmatprep.subr.mxu0 0.0
    %1141 = vmatpush1.msra.mxu0 0.0
    %1142 = vmatprep.subr.mxu0 0.0
    %1143 = vmatpush1.msra.mxu0 0.0
    %1144 = vmatprep.subr.mxu0 0.0
    %1145 = vmatpush1.msra.mxu0 0.0
    %1146 = vmatprep.subr.mxu0 0.0
    %1147 = vmatpush1.msra.mxu0 0.0
    %1148 = vmatprep.subr.mxu0 0.0
    %1149 = vmatpush1.msra.mxu0 0.0
    %1150 = vmatprep.subr.mxu0 0.0
    %1151 = vmatpush1.msra.mxu0 0.0
    %1152 = vmatprep.subr.mxu0 0.0
    %1153 = vmatpush1.msra.mxu0 0.0
    %1154 = vmatprep.subr.mxu0 0.0
    %1155 = vmatpush1.msra.mxu0 0.0
    %1156 = vmatprep.subr.mxu0 0.0
    %1157 = vmatpush1.msra.mxu0 0.0
    %1158 = vmatprep.subr.mxu0 0.0
    %1159 = vmatpush1.msra.mxu0 0.0
    %1160 = vmatprep.subr.mxu0 0.0
    %1161 = vmatpush1.msra.mxu0 0.0
    %1162 = vmatprep.subr.mxu0 0.0
    %1163 = vmatpush1.msra.mxu0 0.0
    %1164 = vmatprep.subr.mxu0 0.0
    %1165 = vmatpush1.msra.mxu0 0.0
    %1166 = vmatprep.subr.mxu0 0.0
    %1167 = vmatpush1.msra.mxu0 0.0
    %1168 = vmatprep.subr.mxu0 0.0
    %1169 = vmatpush1.msra.mxu0 0.0
    %1170 = vmatprep.subr.mxu0 0.0
    %1171 = vmatpush1.msra.mxu0 0.0
    %1172 = vmatprep.subr.mxu0 0.0
    %1173 = vmatpush1.msra.mxu0 0.0
    %1174 = vmatprep.mubr.f32.mxu0 0.0
    %1175 = vmatmul.mubr.f32.gmra.mrb[0].mxu0 %v1105
    %v1176 = vpop.f32.mrb[0].mxu0
    %v1177 = vadd.f32 0.0, %v1176
    %v1178 = vpop.f32.mrb[0].mxu0
    %1179 = vmatprep.mubr.f32.mxu0 0.0
    %1180 = vmatmul.mubr.f32.gmra.mrb[0].mxu0 %v1108
    %v1181 = vpop.f32.mrb[0].mxu0
    %v1182 = vadd.f32 0.0, %v1181
    %v1183 = vpop.f32.mrb[0].mxu0
    %1184 = vdwg.mxu0
    %v1185 = vadd.f32 %v42, %v1177
    %v1186 = vadd.f32 %v43, %v1182
    %v1188 = vsel %vm79, %v1013, 0
    %v1191 = vsel %vm79, %v1014, 0
    %v1194 = vsel %vm79, %v252, 0
    %1196 = vmatprep.subr.mxu0 0.0
    %1197 = vmatpush1.xpose.msra.mxu0 %v1194
    %1198 = vmatprep.subr.mxu0 0.0
    %1199 = vmatpush1.xpose.msra.mxu0 0.0
    %1200 = vmatprep.subr.mxu0 0.0
    %1201 = vmatpush1.xpose.msra.mxu0 0.0
    %1202 = vmatprep.subr.mxu0 0.0
    %1203 = vmatpush1.xpose.msra.mxu0 0.0
    %1204 = vmatprep.subr.mxu0 0.0
    %1205 = vmatpush1.xpose.msra.mxu0 0.0
    %1206 = vmatprep.subr.mxu0 0.0
    %1207 = vmatpush1.xpose.msra.mxu0 0.0
    %1208 = vmatprep.subr.mxu0 0.0
    %1209 = vmatpush1.xpose.msra.mxu0 0.0
    %1210 = vmatprep.subr.mxu0 0.0
    %1211 = vmatpush1.xpose.msra.mxu0 0.0
    %1212 = vmatprep.subr.mxu0 0.0
    %1213 = vmatpush1.xpose.msra.mxu0 0.0
    %1214 = vmatprep.subr.mxu0 0.0
    %1215 = vmatpush1.xpose.msra.mxu0 0.0
    %1216 = vmatprep.subr.mxu0 0.0
    %1217 = vmatpush1.xpose.msra.mxu0 0.0
    %1218 = vmatprep.subr.mxu0 0.0
    %1219 = vmatpush1.xpose.msra.mxu0 0.0
    %1220 = vmatprep.subr.mxu0 0.0
    %1221 = vmatpush1.xpose.msra.mxu0 0.0
    %1222 = vmatprep.subr.mxu0 0.0
    %1223 = vmatpush1.xpose.msra.mxu0 0.0
    %1224 = vmatprep.subr.mxu0 0.0
    %1225 = vmatpush1.xpose.msra.mxu0 0.0
    %1226 = vmatprep.subr.mxu0 0.0
    %1227 = vmatpush1.xpose.msra.mxu0 0.0
    %1228 = vmatprep.subr.mxu0 0.0
    %1229 = vmatpush1.xpose.msra.mxu0 0.0
    %1230 = vmatprep.subr.mxu0 0.0
    %1231 = vmatpush1.xpose.msra.mxu0 0.0
    %1232 = vmatprep.subr.mxu0 0.0
    %1233 = vmatpush1.xpose.msra.mxu0 0.0
    %1234 = vmatprep.subr.mxu0 0.0
    %1235 = vmatpush1.xpose.msra.mxu0 0.0
    %1236 = vmatprep.subr.mxu0 0.0
    %1237 = vmatpush1.xpose.msra.mxu0 0.0
    %1238 = vmatprep.subr.mxu0 0.0
    %1239 = vmatpush1.xpose.msra.mxu0 0.0
    %1240 = vmatprep.subr.mxu0 0.0
    %1241 = vmatpush1.xpose.msra.mxu0 0.0
    %1242 = vmatprep.subr.mxu0 0.0
    %1243 = vmatpush1.xpose.msra.mxu0 0.0
    %1244 = vmatprep.subr.mxu0 0.0
    %1245 = vmatpush1.xpose.msra.mxu0 0.0
    %1246 = vmatprep.subr.mxu0 0.0
    %1247 = vmatpush1.xpose.msra.mxu0 0.0
    %1248 = vmatprep.subr.mxu0 0.0
    %1249 = vmatpush1.xpose.msra.mxu0 0.0
    %1250 = vmatprep.subr.mxu0 0.0
    %1251 = vmatpush1.xpose.msra.mxu0 0.0
    %1252 = vmatprep.subr.mxu0 0.0
    %1253 = vmatpush1.xpose.msra.mxu0 0.0
    %1254 = vmatprep.subr.mxu0 0.0
    %1255 = vmatpush1.xpose.msra.mxu0 0.0
    %1256 = vmatprep.subr.mxu0 0.0
    %1257 = vmatpush1.xpose.msra.mxu0 0.0
    %1258 = vmatprep.subr.mxu0 0.0
    %1259 = vmatpush1.xpose.msra.mxu0 0.0
    %1260 = vmatprep.mubr.f32.mxu0 0.0
    %1261 = vmatmul.mubr.f32.gmra.mrb[0].mxu0 %v1188
    %v1262 = vpop.f32.mrb[0].mxu0
    %v1263 = vadd.f32 0.0, %v1262
    %v1264 = vpop.f32.mrb[0].mxu0
    %1265 = vmatprep.mubr.f32.mxu0 0.0
    %1266 = vmatmul.mubr.f32.gmra.mrb[0].mxu0 %v1191
    %v1267 = vpop.f32.mrb[0].mxu0
    %v1268 = vadd.f32 0.0, %v1267
    %v1269 = vpop.f32.mrb[0].mxu0
    %1270 = vdwg.mxu0
    %v1271 = vld [vmem:[%s4 + $0x8] sm:$0xff]
    %v1273 = vsel %vm350, %v1263, 0
    %v1276 = vsel %vm350, %v1268, 0
    %1278 = vmatprep.subr.mxu0 0.0
    %1279 = vmatpush1.msra.mxu0 %v1271
    %1280 = vmatprep.subr.mxu0 0.0
    %1281 = vmatpush1.msra.mxu0 0.0
    %1282 = vmatprep.subr.mxu0 0.0
    %1283 = vmatpush1.msra.mxu0 0.0
    %1284 = vmatprep.subr.mxu0 0.0
    %1285 = vmatpush1.msra.mxu0 0.0
    %1286 = vmatprep.subr.mxu0 0.0
    %1287 = vmatpush1.msra.mxu0 0.0
    %1288 = vmatprep.subr.mxu0 0.0
    %1289 = vmatpush1.msra.mxu0 0.0
    %1290 = vmatprep.subr.mxu0 0.0
    %1291 = vmatpush1.msra.mxu0 0.0
    %1292 = vmatprep.subr.mxu0 0.0
    %1293 = vmatpush1.msra.mxu0 0.0
    %1294 = vmatprep.subr.mxu0 0.0
    %1295 = vmatpush1.msra.mxu0 0.0
    %1296 = vmatprep.subr.mxu0 0.0
    %1297 = vmatpush1.msra.mxu0 0.0
    %1298 = vmatprep.subr.mxu0 0.0
    %1299 = vmatpush1.msra.mxu0 0.0
    %1300 = vmatprep.subr.mxu0 0.0
    %1301 = vmatpush1.msra.mxu0 0.0
    %1302 = vmatprep.subr.mxu0 0.0
    %1303 = vmatpush1.msra.mxu0 0.0
    %1304 = vmatprep.subr.mxu0 0.0
    %1305 = vmatpush1.msra.mxu0 0.0
    %1306 = vmatprep.subr.mxu0 0.0
    %1307 = vmatpush1.msra.mxu0 0.0
    %1308 = vmatprep.subr.mxu0 0.0
    %1309 = vmatpush1.msra.mxu0 0.0
    %1310 = vmatprep.subr.mxu0 0.0
    %1311 = vmatpush1.msra.mxu0 0.0
    %1312 = vmatprep.subr.mxu0 0.0
    %1313 = vmatpush1.msra.mxu0 0.0
    %1314 = vmatprep.subr.mxu0 0.0
    %1315 = vmatpush1.msra.mxu0 0.0
    %1316 = vmatprep.subr.mxu0 0.0
    %1317 = vmatpush1.msra.mxu0 0.0
    %1318 = vmatprep.subr.mxu0 0.0
    %1319 = vmatpush1.msra.mxu0 0.0
    %1320 = vmatprep.subr.mxu0 0.0
    %1321 = vmatpush1.msra.mxu0 0.0
    %1322 = vmatprep.subr.mxu0 0.0
    %1323 = vmatpush1.msra.mxu0 0.0
    %1324 = vmatprep.subr.mxu0 0.0
    %1325 = vmatpush1.msra.mxu0 0.0
    %1326 = vmatprep.subr.mxu0 0.0
    %1327 = vmatpush1.msra.mxu0 0.0
    %1328 = vmatprep.subr.mxu0 0.0
    %1329 = vmatpush1.msra.mxu0 0.0
    %1330 = vmatprep.subr.mxu0 0.0
    %1331 = vmatpush1.msra.mxu0 0.0
    %1332 = vmatprep.subr.mxu0 0.0
    %1333 = vmatpush1.msra.mxu0 0.0
    %1334 = vmatprep.subr.mxu0 0.0
    %1335 = vmatpush1.msra.mxu0 0.0
    %1336 = vmatprep.subr.mxu0 0.0
    %1337 = vmatpush1.msra.mxu0 0.0
    %1338 = vmatprep.subr.mxu0 0.0
    %1339 = vmatpush1.msra.mxu0 0.0
    %1340 = vmatprep.subr.mxu0 0.0
    %1341 = vmatpush1.msra.mxu0 0.0
    %1342 = vmatprep.mubr.f32.mxu0 0.0
    %1343 = vmatmul.mubr.f32.gmra.mrb[0].mxu0 %v1273
    %v1344 = vpop.f32.mrb[0].mxu0
    %v1345 = vadd.f32 0.0, %v1344
    %v1346 = vpop.f32.mrb[0].mxu0
    %1347 = vmatprep.mubr.f32.mxu0 0.0
    %1348 = vmatmul.mubr.f32.gmra.mrb[0].mxu0 %v1276
    %v1349 = vpop.f32.mrb[0].mxu0
    %v1350 = vadd.f32 0.0, %v1349
    %v1351 = vpop.f32.mrb[0].mxu0
    %1352 = vdwg.mxu0
    %v1353 = vadd.f32 %v1185, %v1345
    %v1354 = vadd.f32 %v1186, %v1350
    %v1356 = vsel %vm79, %v1015, 0
    %v1359 = vsel %vm79, %v1016, 0
    %v1362 = vsel %vm79, %v257, 0
    %1364 = vmatprep.subr.mxu0 0.0
    %1365 = vmatpush1.xpose.msra.mxu0 %v1362
    %1366 = vmatprep.subr.mxu0 0.0
    %1367 = vmatpush1.xpose.msra.mxu0 0.0
    %1368 = vmatprep.subr.mxu0 0.0
    %1369 = vmatpush1.xpose.msra.mxu0 0.0
    %1370 = vmatprep.subr.mxu0 0.0
    %1371 = vmatpush1.xpose.msra.mxu0 0.0
    %1372 = vmatprep.subr.mxu0 0.0
    %1373 = vmatpush1.xpose.msra.mxu0 0.0
    %1374 = vmatprep.subr.mxu0 0.0
    %1375 = vmatpush1.xpose.msra.mxu0 0.0
    %1376 = vmatprep.subr.mxu0 0.0
    %1377 = vmatpush1.xpose.msra.mxu0 0.0
    %1378 = vmatprep.subr.mxu0 0.0
    %1379 = vmatpush1.xpose.msra.mxu0 0.0
    %1380 = vmatprep.subr.mxu0 0.0
    %1381 = vmatpush1.xpose.msra.mxu0 0.0
    %1382 = vmatprep.subr.mxu0 0.0
    %1383 = vmatpush1.xpose.msra.mxu0 0.0
    %1384 = vmatprep.subr.mxu0 0.0
    %1385 = vmatpush1.xpose.msra.mxu0 0.0
    %1386 = vmatprep.subr.mxu0 0.0
    %1387 = vmatpush1.xpose.msra.mxu0 0.0
    %1388 = vmatprep.subr.mxu0 0.0
    %1389 = vmatpush1.xpose.msra.mxu0 0.0
    %1390 = vmatprep.subr.mxu0 0.0
    %1391 = vmatpush1.xpose.msra.mxu0 0.0
    %1392 = vmatprep.subr.mxu0 0.0
    %1393 = vmatpush1.xpose.msra.mxu0 0.0
    %1394 = vmatprep.subr.mxu0 0.0
    %1395 = vmatpush1.xpose.msra.mxu0 0.0
    %1396 = vmatprep.subr.mxu0 0.0
    %1397 = vmatpush1.xpose.msra.mxu0 0.0
    %1398 = vmatprep.subr.mxu0 0.0
    %1399 = vmatpush1.xpose.msra.mxu0 0.0
    %1400 = vmatprep.subr.mxu0 0.0
    %1401 = vmatpush1.xpose.msra.mxu0 0.0
    %1402 = vmatprep.subr.mxu0 0.0
    %1403 = vmatpush1.xpose.msra.mxu0 0.0
    %1404 = vmatprep.subr.mxu0 0.0
    %1405 = vmatpush1.xpose.msra.mxu0 0.0
    %1406 = vmatprep.subr.mxu0 0.0
    %1407 = vmatpush1.xpose.msra.mxu0 0.0
    %1408 = vmatprep.subr.mxu0 0.0
    %1409 = vmatpush1.xpose.msra.mxu0 0.0
    %1410 = vmatprep.subr.mxu0 0.0
    %1411 = vmatpush1.xpose.msra.mxu0 0.0
    %1412 = vmatprep.subr.mxu0 0.0
    %1413 = vmatpush1.xpose.msra.mxu0 0.0
    %1414 = vmatprep.subr.mxu0 0.0
    %1415 = vmatpush1.xpose.msra.mxu0 0.0
    %1416 = vmatprep.subr.mxu0 0.0
    %1417 = vmatpush1.xpose.msra.mxu0 0.0
    %1418 = vmatprep.subr.mxu0 0.0
    %1419 = vmatpush1.xpose.msra.mxu0 0.0
    %1420 = vmatprep.subr.mxu0 0.0
    %1421 = vmatpush1.xpose.msra.mxu0 0.0
    %1422 = vmatprep.subr.mxu0 0.0
    %1423 = vmatpush1.xpose.msra.mxu0 0.0
    %1424 = vmatprep.subr.mxu0 0.0
    %1425 = vmatpush1.xpose.msra.mxu0 0.0
    %1426 = vmatprep.subr.mxu0 0.0
    %1427 = vmatpush1.xpose.msra.mxu0 0.0
    %1428 = vmatprep.mubr.f32.mxu0 0.0
    %1429 = vmatmul.mubr.f32.gmra.mrb[0].mxu0 %v1356
    %v1430 = vpop.f32.mrb[0].mxu0
    %v1431 = vadd.f32 0.0, %v1430
    %v1432 = vpop.f32.mrb[0].mxu0
    %1433 = vmatprep.mubr.f32.mxu0 0.0
    %1434 = vmatmul.mubr.f32.gmra.mrb[0].mxu0 %v1359
    %v1435 = vpop.f32.mrb[0].mxu0
    %v1436 = vadd.f32 0.0, %v1435
    %v1437 = vpop.f32.mrb[0].mxu0
    %1438 = vdwg.mxu0
    %v1439 = vld [vmem:[%s4 + $0x10] sm:$0xff]
    %v1441 = vsel %vm350, %v1431, 0
    %v1444 = vsel %vm350, %v1436, 0
    %1446 = vmatprep.subr.mxu0 0.0
    %1447 = vmatpush1.msra.mxu0 %v1439
    %1448 = vmatprep.subr.mxu0 0.0
    %1449 = vmatpush1.msra.mxu0 0.0
    %1450 = vmatprep.subr.mxu0 0.0
    %1451 = vmatpush1.msra.mxu0 0.0
    %1452 = vmatprep.subr.mxu0 0.0
    %1453 = vmatpush1.msra.mxu0 0.0
    %1454 = vmatprep.subr.mxu0 0.0
    %1455 = vmatpush1.msra.mxu0 0.0
    %1456 = vmatprep.subr.mxu0 0.0
    %1457 = vmatpush1.msra.mxu0 0.0
    %1458 = vmatprep.subr.mxu0 0.0
    %1459 = vmatpush1.msra.mxu0 0.0
    %1460 = vmatprep.subr.mxu0 0.0
    %1461 = vmatpush1.msra.mxu0 0.0
    %1462 = vmatprep.subr.mxu0 0.0
    %1463 = vmatpush1.msra.mxu0 0.0
    %1464 = vmatprep.subr.mxu0 0.0
    %1465 = vmatpush1.msra.mxu0 0.0
    %1466 = vmatprep.subr.mxu0 0.0
    %1467 = vmatpush1.msra.mxu0 0.0
    %1468 = vmatprep.subr.mxu0 0.0
    %1469 = vmatpush1.msra.mxu0 0.0
    %1470 = vmatprep.subr.mxu0 0.0
    %1471 = vmatpush1.msra.mxu0 0.0
    %1472 = vmatprep.subr.mxu0 0.0
    %1473 = vmatpush1.msra.mxu0 0.0
    %1474 = vmatprep.subr.mxu0 0.0
    %1475 = vmatpush1.msra.mxu0 0.0
    %1476 = vmatprep.subr.mxu0 0.0
    %1477 = vmatpush1.msra.mxu0 0.0
    %1478 = vmatprep.subr.mxu0 0.0
    %1479 = vmatpush1.msra.mxu0 0.0
    %1480 = vmatprep.subr.mxu0 0.0
    %1481 = vmatpush1.msra.mxu0 0.0
    %1482 = vmatprep.subr.mxu0 0.0
    %1483 = vmatpush1.msra.mxu0 0.0
    %1484 = vmatprep.subr.mxu0 0.0
    %1485 = vmatpush1.msra.mxu0 0.0
    %1486 = vmatprep.subr.mxu0 0.0
    %1487 = vmatpush1.msra.mxu0 0.0
    %1488 = vmatprep.subr.mxu0 0.0
    %1489 = vmatpush1.msra.mxu0 0.0
    %1490 = vmatprep.subr.mxu0 0.0
    %1491 = vmatpush1.msra.mxu0 0.0
    %1492 = vmatprep.subr.mxu0 0.0
    %1493 = vmatpush1.msra.mxu0 0.0
    %1494 = vmatprep.subr.mxu0 0.0
    %1495 = vmatpush1.msra.mxu0 0.0
    %1496 = vmatprep.subr.mxu0 0.0
    %1497 = vmatpush1.msra.mxu0 0.0
    %1498 = vmatprep.subr.mxu0 0.0
    %1499 = vmatpush1.msra.mxu0 0.0
    %1500 = vmatprep.subr.mxu0 0.0
    %1501 = vmatpush1.msra.mxu0 0.0
    %1502 = vmatprep.subr.mxu0 0.0
    %1503 = vmatpush1.msra.mxu0 0.0
    %1504 = vmatprep.subr.mxu0 0.0
    %1505 = vmatpush1.msra.mxu0 0.0
    %1506 = vmatprep.subr.mxu0 0.0
    %1507 = vmatpush1.msra.mxu0 0.0
    %1508 = vmatprep.subr.mxu0 0.0
    %1509 = vmatpush1.msra.mxu0 0.0
    %1510 = vmatprep.mubr.f32.mxu0 0.0
    %1511 = vmatmul.mubr.f32.gmra.mrb[0].mxu0 %v1441
    %v1512 = vpop.f32.mrb[0].mxu0
    %v1513 = vadd.f32 0.0, %v1512
    %v1514 = vpop.f32.mrb[0].mxu0
    %1515 = vmatprep.mubr.f32.mxu0 0.0
    %1516 = vmatmul.mubr.f32.gmra.mrb[0].mxu0 %v1444
    %v1517 = vpop.f32.mrb[0].mxu0
    %v1518 = vadd.f32 0.0, %v1517
    %v1519 = vpop.f32.mrb[0].mxu0
    %1520 = vdwg.mxu0
    %v1521 = vadd.f32 %v1353, %v1513
    %v1522 = vadd.f32 %v1354, %v1518
    %v1524 = vsel %vm79, %v1017, 0
    %v1527 = vsel %vm79, %v1018, 0
    %v1530 = vsel %vm79, %v262, 0
    %1532 = vmatprep.subr.mxu0 0.0
    %1533 = vmatpush1.xpose.msra.mxu0 %v1530
    %1534 = vmatprep.subr.mxu0 0.0
    %1535 = vmatpush1.xpose.msra.mxu0 0.0
    %1536 = vmatprep.subr.mxu0 0.0
    %1537 = vmatpush1.xpose.msra.mxu0 0.0
    %1538 = vmatprep.subr.mxu0 0.0
    %1539 = vmatpush1.xpose.msra.mxu0 0.0
    %1540 = vmatprep.subr.mxu0 0.0
    %1541 = vmatpush1.xpose.msra.mxu0 0.0
    %1542 = vmatprep.subr.mxu0 0.0
    %1543 = vmatpush1.xpose.msra.mxu0 0.0
    %1544 = vmatprep.subr.mxu0 0.0
    %1545 = vmatpush1.xpose.msra.mxu0 0.0
    %1546 = vmatprep.subr.mxu0 0.0
    %1547 = vmatpush1.xpose.msra.mxu0 0.0
    %1548 = vmatprep.subr.mxu0 0.0
    %1549 = vmatpush1.xpose.msra.mxu0 0.0
    %1550 = vmatprep.subr.mxu0 0.0
    %1551 = vmatpush1.xpose.msra.mxu0 0.0
    %1552 = vmatprep.subr.mxu0 0.0
    %1553 = vmatpush1.xpose.msra.mxu0 0.0
    %1554 = vmatprep.subr.mxu0 0.0
    %1555 = vmatpush1.xpose.msra.mxu0 0.0
    %1556 = vmatprep.subr.mxu0 0.0
    %1557 = vmatpush1.xpose.msra.mxu0 0.0
    %1558 = vmatprep.subr.mxu0 0.0
    %1559 = vmatpush1.xpose.msra.mxu0 0.0
    %1560 = vmatprep.subr.mxu0 0.0
    %1561 = vmatpush1.xpose.msra.mxu0 0.0
    %1562 = vmatprep.subr.mxu0 0.0
    %1563 = vmatpush1.xpose.msra.mxu0 0.0
    %1564 = vmatprep.subr.mxu0 0.0
    %1565 = vmatpush1.xpose.msra.mxu0 0.0
    %1566 = vmatprep.subr.mxu0 0.0
    %1567 = vmatpush1.xpose.msra.mxu0 0.0
    %1568 = vmatprep.subr.mxu0 0.0
    %1569 = vmatpush1.xpose.msra.mxu0 0.0
    %1570 = vmatprep.subr.mxu0 0.0
    %1571 = vmatpush1.xpose.msra.mxu0 0.0
    %1572 = vmatprep.subr.mxu0 0.0
    %1573 = vmatpush1.xpose.msra.mxu0 0.0
    %1574 = vmatprep.subr.mxu0 0.0
    %1575 = vmatpush1.xpose.msra.mxu0 0.0
    %1576 = vmatprep.subr.mxu0 0.0
    %1577 = vmatpush1.xpose.msra.mxu0 0.0
    %1578 = vmatprep.subr.mxu0 0.0
    %1579 = vmatpush1.xpose.msra.mxu0 0.0
    %1580 = vmatprep.subr.mxu0 0.0
    %1581 = vmatpush1.xpose.msra.mxu0 0.0
    %1582 = vmatprep.subr.mxu0 0.0
    %1583 = vmatpush1.xpose.msra.mxu0 0.0
    %1584 = vmatprep.subr.mxu0 0.0
    %1585 = vmatpush1.xpose.msra.mxu0 0.0
    %1586 = vmatprep.subr.mxu0 0.0
    %1587 = vmatpush1.xpose.msra.mxu0 0.0
    %1588 = vmatprep.subr.mxu0 0.0
    %1589 = vmatpush1.xpose.msra.mxu0 0.0
    %1590 = vmatprep.subr.mxu0 0.0
    %1591 = vmatpush1.xpose.msra.mxu0 0.0
    %1592 = vmatprep.subr.mxu0 0.0
    %1593 = vmatpush1.xpose.msra.mxu0 0.0
    %1594 = vmatprep.subr.mxu0 0.0
    %1595 = vmatpush1.xpose.msra.mxu0 0.0
    %1596 = vmatprep.mubr.f32.mxu0 0.0
    %1597 = vmatmul.mubr.f32.gmra.mrb[0].mxu0 %v1524
    %v1598 = vpop.f32.mrb[0].mxu0
    %v1599 = vadd.f32 0.0, %v1598
    %v1600 = vpop.f32.mrb[0].mxu0
    %1601 = vmatprep.mubr.f32.mxu0 0.0
    %1602 = vmatmul.mubr.f32.gmra.mrb[0].mxu0 %v1527
    %v1603 = vpop.f32.mrb[0].mxu0
    %v1604 = vadd.f32 0.0, %v1603
    %v1605 = vpop.f32.mrb[0].mxu0
    %1606 = vdwg.mxu0
    %v1607 = vld [vmem:[%s4 + $0x18] sm:$0xff]
    %v1609 = vsel %vm350, %v1599, 0
    %v1612 = vsel %vm350, %v1604, 0
    %1614 = vmatprep.subr.mxu0 0.0
    %1615 = vmatpush1.msra.mxu0 %v1607
    %1616 = vmatprep.subr.mxu0 0.0
    %1617 = vmatpush1.msra.mxu0 0.0
    %1618 = vmatprep.subr.mxu0 0.0
    %1619 = vmatpush1.msra.mxu0 0.0
    %1620 = vmatprep.subr.mxu0 0.0
    %1621 = vmatpush1.msra.mxu0 0.0
    %1622 = vmatprep.subr.mxu0 0.0
    %1623 = vmatpush1.msra.mxu0 0.0
    %1624 = vmatprep.subr.mxu0 0.0
    %1625 = vmatpush1.msra.mxu0 0.0
    %1626 = vmatprep.subr.mxu0 0.0
    %1627 = vmatpush1.msra.mxu0 0.0
    %1628 = vmatprep.subr.mxu0 0.0
    %1629 = vmatpush1.msra.mxu0 0.0
    %1630 = vmatprep.subr.mxu0 0.0
    %1631 = vmatpush1.msra.mxu0 0.0
    %1632 = vmatprep.subr.mxu0 0.0
    %1633 = vmatpush1.msra.mxu0 0.0
    %1634 = vmatprep.subr.mxu0 0.0
    %1635 = vmatpush1.msra.mxu0 0.0
    %1636 = vmatprep.subr.mxu0 0.0
    %1637 = vmatpush1.msra.mxu0 0.0
    %1638 = vmatprep.subr.mxu0 0.0
    %1639 = vmatpush1.msra.mxu0 0.0
    %1640 = vmatprep.subr.mxu0 0.0
    %1641 = vmatpush1.msra.mxu0 0.0
    %1642 = vmatprep.subr.mxu0 0.0
    %1643 = vmatpush1.msra.mxu0 0.0
    %1644 = vmatprep.subr.mxu0 0.0
    %1645 = vmatpush1.msra.mxu0 0.0
    %1646 = vmatprep.subr.mxu0 0.0
    %1647 = vmatpush1.msra.mxu0 0.0
    %1648 = vmatprep.subr.mxu0 0.0
    %1649 = vmatpush1.msra.mxu0 0.0
    %1650 = vmatprep.subr.mxu0 0.0
    %1651 = vmatpush1.msra.mxu0 0.0
    %1652 = vmatprep.subr.mxu0 0.0
    %1653 = vmatpush1.msra.mxu0 0.0
    %1654 = vmatprep.subr.mxu0 0.0
    %1655 = vmatpush1.msra.mxu0 0.0
    %1656 = vmatprep.subr.mxu0 0.0
    %1657 = vmatpush1.msra.mxu0 0.0
    %1658 = vmatprep.subr.mxu0 0.0
    %1659 = vmatpush1.msra.mxu0 0.0
    %1660 = vmatprep.subr.mxu0 0.0
    %1661 = vmatpush1.msra.mxu0 0.0
    %1662 = vmatprep.subr.mxu0 0.0
    %1663 = vmatpush1.msra.mxu0 0.0
    %1664 = vmatprep.subr.mxu0 0.0
    %1665 = vmatpush1.msra.mxu0 0.0
    %1666 = vmatprep.subr.mxu0 0.0
    %1667 = vmatpush1.msra.mxu0 0.0
    %1668 = vmatprep.subr.mxu0 0.0
    %1669 = vmatpush1.msra.mxu0 0.0
    %1670 = vmatprep.subr.mxu0 0.0
    %1671 = vmatpush1.msra.mxu0 0.0
    %1672 = vmatprep.subr.mxu0 0.0
    %1673 = vmatpush1.msra.mxu0 0.0
    %1674 = vmatprep.subr.mxu0 0.0
    %1675 = vmatpush1.msra.mxu0 0.0
    %1676 = vmatprep.subr.mxu0 0.0
    %1677 = vmatpush1.msra.mxu0 0.0
    %1678 = vmatprep.mubr.f32.mxu0 0.0
    %1679 = vmatmul.mubr.f32.gmra.mrb[0].mxu0 %v1609
    %v1680 = vpop.f32.mrb[0].mxu0
    %v1681 = vadd.f32 0.0, %v1680
    %v1682 = vpop.f32.mrb[0].mxu0
    %1683 = vmatprep.mubr.f32.mxu0 0.0
    %1684 = vmatmul.mubr.f32.gmra.mrb[0].mxu0 %v1612
    %v1685 = vpop.f32.mrb[0].mxu0
    %v1686 = vadd.f32 0.0, %v1685
    %v1687 = vpop.f32.mrb[0].mxu0
    %1688 = vdwg.mxu0
    %v1689 = vadd.f32 %v1521, %v1681
    %v1690 = vadd.f32 %v1522, %v1686
    %v1691 = vmul.f32 %v1689, %v1689
    %v1692 = vmul.f32 %v1690, %v1690
    %v1693 = vsel %vm50, %v1691, 0.0
    %1694 = vadd.xlane.f32.xlu0 %v1693
    %v1695 = vpop.xlane.xlu0 %1694
    %v1696 = vsel %vm50, %v1692, 0.0
    %1697 = vadd.xlane.f32.xlu0 %v1696
    %v1698 = vpop.xlane.xlu0 %1697
    %v1699 = vmul.f32 %v1695, %v57
    %v1700 = vmul.f32 %v1698, %v57
    %v1701 = vadd.f32 %v1699, 1e-08
    %v1702 = vadd.f32 %v1700, 1e-08
    %v1703 = vrsqrt.pop %v1701
    %v1704 = vrsqrt.pop %v1702
    %v1705 = vld [vmem:[%s7] sm:$0x1]
    %v1707 = vlaneseq
    %v1708 = vshrl.u32 %v1707, 7
    %v1709 = vsub.s32 0, %v1708
    %v1710 = vrot.slane %v1705, %v1709
    %v1712 = vmul.f32 %v1710, %v1703
    %v1713 = vmul.f32 %v1710, %v1704
    %v1714 = vmul.f32 %v1689, %v1712
    %v1715 = vmul.f32 %v1690, %v1713
    %v1716 = vld [vmem:[%s8] sm:$0xff]
    %v1717 = vld [vmem:[%s8 + $0x8] sm:$0xff]
    %v1718 = vld [vmem:[%s8 + $0x10] sm:$0xff]
    %v1719 = vld [vmem:[%s8 + $0x18] sm:$0xff]
    %v1721 = vsel %vm50, %v1714, 0
    %v1724 = vsel %vm50, %v1715, 0
    %1726 = vmatprep.subr.mxu0 0.0
    %1727 = vmatpush1.msra.mxu0 %v1716
    %1728 = vmatprep.subr.mxu0 0.0
    %1729 = vmatpush1.msra.mxu0 %v1717
    %1730 = vmatprep.subr.mxu0 0.0
    %1731 = vmatpush1.msra.mxu0 %v1718
    %1732 = vmatprep.subr.mxu0 0.0
    %1733 = vmatpush1.msra.mxu0 %v1719
    %1734 = vmatprep.subr.mxu0 0.0
    %1735 = vmatpush1.msra.mxu0 0.0
    %1736 = vmatprep.subr.mxu0 0.0
    %1737 = vmatpush1.msra.mxu0 0.0
    %1738 = vmatprep.subr.mxu0 0.0
    %1739 = vmatpush1.msra.mxu0 0.0
    %1740 = vmatprep.subr.mxu0 0.0
    %1741 = vmatpush1.msra.mxu0 0.0
    %1742 = vmatprep.subr.mxu0 0.0
    %1743 = vmatpush1.msra.mxu0 0.0
    %1744 = vmatprep.subr.mxu0 0.0
    %1745 = vmatpush1.msra.mxu0 0.0
    %1746 = vmatprep.subr.mxu0 0.0
    %1747 = vmatpush1.msra.mxu0 0.0
    %1748 = vmatprep.subr.mxu0 0.0
    %1749 = vmatpush1.msra.mxu0 0.0
    %1750 = vmatprep.subr.mxu0 0.0
    %1751 = vmatpush1.msra.mxu0 0.0
    %1752 = vmatprep.subr.mxu0 0.0
    %1753 = vmatpush1.msra.mxu0 0.0
    %1754 = vmatprep.subr.mxu0 0.0
    %1755 = vmatpush1.msra.mxu0 0.0
    %1756 = vmatprep.subr.mxu0 0.0
    %1757 = vmatpush1.msra.mxu0 0.0
    %1758 = vmatprep.subr.mxu0 0.0
    %1759 = vmatpush1.msra.mxu0 0.0
    %1760 = vmatprep.subr.mxu0 0.0
    %1761 = vmatpush1.msra.mxu0 0.0
    %1762 = vmatprep.subr.mxu0 0.0
    %1763 = vmatpush1.msra.mxu0 0.0
    %1764 = vmatprep.subr.mxu0 0.0
    %1765 = vmatpush1.msra.mxu0 0.0
    %1766 = vmatprep.subr.mxu0 0.0
    %1767 = vmatpush1.msra.mxu0 0.0
    %1768 = vmatprep.subr.mxu0 0.0
    %1769 = vmatpush1.msra.mxu0 0.0
    %1770 = vmatprep.subr.mxu0 0.0
    %1771 = vmatpush1.msra.mxu0 0.0
    %1772 = vmatprep.subr.mxu0 0.0
    %1773 = vmatpush1.msra.mxu0 0.0
    %1774 = vmatprep.subr.mxu0 0.0
    %1775 = vmatpush1.msra.mxu0 0.0
    %1776 = vmatprep.subr.mxu0 0.0
    %1777 = vmatpush1.msra.mxu0 0.0
    %1778 = vmatprep.subr.mxu0 0.0
    %1779 = vmatpush1.msra.mxu0 0.0
    %1780 = vmatprep.subr.mxu0 0.0
    %1781 = vmatpush1.msra.mxu0 0.0
    %1782 = vmatprep.subr.mxu0 0.0
    %1783 = vmatpush1.msra.mxu0 0.0
    %1784 = vmatprep.subr.mxu0 0.0
    %1785 = vmatpush1.msra.mxu0 0.0
    %1786 = vmatprep.subr.mxu0 0.0
    %1787 = vmatpush1.msra.mxu0 0.0
    %1788 = vmatprep.subr.mxu0 0.0
    %1789 = vmatpush1.msra.mxu0 0.0
    %1790 = vmatprep.mubr.f32.mxu0 0.0
    %1791 = vmatmul.mubr.f32.gmra.mrb[0].mxu0 %v1721
    %v1792 = vpop.f32.mrb[0].mxu0
    %v1793 = vadd.f32 0.0, %v1792
    %v1794 = vpop.f32.mrb[0].mxu0
    %1795 = vmatprep.mubr.f32.mxu0 0.0
    %1796 = vmatmul.mubr.f32.gmra.mrb[0].mxu0 %v1724
    %v1797 = vpop.f32.mrb[0].mxu0
    %v1798 = vadd.f32 0.0, %v1797
    %v1799 = vpop.f32.mrb[0].mxu0
    %1800 = vdwg.mxu0
    %v1801 = vld [vmem:[%s9] sm:$0xff]
    %v1802 = vld [vmem:[%s9 + $0x8] sm:$0xff]
    %v1803 = vld [vmem:[%s9 + $0x10] sm:$0xff]
    %v1804 = vld [vmem:[%s9 + $0x18] sm:$0xff]
    %1805 = vmatprep.subr.mxu0 0.0
    %1806 = vmatpush1.msra.mxu0 %v1801
    %1807 = vmatprep.subr.mxu0 0.0
    %1808 = vmatpush1.msra.mxu0 %v1802
    %1809 = vmatprep.subr.mxu0 0.0
    %1810 = vmatpush1.msra.mxu0 %v1803
    %1811 = vmatprep.subr.mxu0 0.0
    %1812 = vmatpush1.msra.mxu0 %v1804
    %1813 = vmatprep.subr.mxu0 0.0
    %1814 = vmatpush1.msra.mxu0 0.0
    %1815 = vmatprep.subr.mxu0 0.0
    %1816 = vmatpush1.msra.mxu0 0.0
    %1817 = vmatprep.subr.mxu0 0.0
    %1818 = vmatpush1.msra.mxu0 0.0
    %1819 = vmatprep.subr.mxu0 0.0
    %1820 = vmatpush1.msra.mxu0 0.0
    %1821 = vmatprep.subr.mxu0 0.0
    %1822 = vmatpush1.msra.mxu0 0.0
    %1823 = vmatprep.subr.mxu0 0.0
    %1824 = vmatpush1.msra.mxu0 0.0
    %1825 = vmatprep.subr.mxu0 0.0
    %1826 = vmatpush1.msra.mxu0 0.0
    %1827 = vmatprep.subr.mxu0 0.0
    %1828 = vmatpush1.msra.mxu0 0.0
    %1829 = vmatprep.subr.mxu0 0.0
    %1830 = vmatpush1.msra.mxu0 0.0
    %1831 = vmatprep.subr.mxu0 0.0
    %1832 = vmatpush1.msra.mxu0 0.0
    %1833 = vmatprep.subr.mxu0 0.0
    %1834 = vmatpush1.msra.mxu0 0.0
    %1835 = vmatprep.subr.mxu0 0.0
    %1836 = vmatpush1.msra.mxu0 0.0
    %1837 = vmatprep.subr.mxu0 0.0
    %1838 = vmatpush1.msra.mxu0 0.0
    %1839 = vmatprep.subr.mxu0 0.0
    %1840 = vmatpush1.msra.mxu0 0.0
    %1841 = vmatprep.subr.mxu0 0.0
    %1842 = vmatpush1.msra.mxu0 0.0
    %1843 = vmatprep.subr.mxu0 0.0
    %1844 = vmatpush1.msra.mxu0 0.0
    %1845 = vmatprep.subr.mxu0 0.0
    %1846 = vmatpush1.msra.mxu0 0.0
    %1847 = vmatprep.subr.mxu0 0.0
    %1848 = vmatpush1.msra.mxu0 0.0
    %1849 = vmatprep.subr.mxu0 0.0
    %1850 = vmatpush1.msra.mxu0 0.0
    %1851 = vmatprep.subr.mxu0 0.0
    %1852 = vmatpush1.msra.mxu0 0.0
    %1853 = vmatprep.subr.mxu0 0.0
    %1854 = vmatpush1.msra.mxu0 0.0
    %1855 = vmatprep.subr.mxu0 0.0
    %1856 = vmatpush1.msra.mxu0 0.0
    %1857 = vmatprep.subr.mxu0 0.0
    %1858 = vmatpush1.msra.mxu0 0.0
    %1859 = vmatprep.subr.mxu0 0.0
    %1860 = vmatpush1.msra.mxu0 0.0
    %1861 = vmatprep.subr.mxu0 0.0
    %1862 = vmatpush1.msra.mxu0 0.0
    %1863 = vmatprep.subr.mxu0 0.0
    %1864 = vmatpush1.msra.mxu0 0.0
    %1865 = vmatprep.subr.mxu0 0.0
    %1866 = vmatpush1.msra.mxu0 0.0
    %1867 = vmatprep.subr.mxu0 0.0
    %1868 = vmatpush1.msra.mxu0 0.0
    %1869 = vmatprep.mubr.f32.mxu0 0.0
    %1870 = vmatmul.mubr.f32.gmra.mrb[0].mxu0 %v1721
    %v1871 = vpop.f32.mrb[0].mxu0
    %v1872 = vadd.f32 0.0, %v1871
    %v1873 = vpop.f32.mrb[0].mxu0
    %1874 = vmatprep.mubr.f32.mxu0 0.0
    %1875 = vmatmul.mubr.f32.gmra.mrb[0].mxu0 %v1724
    %v1876 = vpop.f32.mrb[0].mxu0
    %v1877 = vadd.f32 0.0, %v1876
    %v1878 = vpop.f32.mrb[0].mxu0
    %1879 = vdwg.mxu0
    %v1880 = vxor.u32 %v1793, 2147483648
    %v1881 = vxor.u32 %v1798, 2147483648
    %v1882 = vmul.f32 %v1880, 1.442695
    %v1883 = vpow.pop %v1882
    %v1884 = vmul.f32 %v1881, 1.442695
    %v1885 = vpow.pop %v1884
    %v1886 = vadd.f32 %v1883, 1.0
    %v1887 = vadd.f32 %v1885, 1.0
    %v1888 = vrcp.pop %v1886
    %v1889 = vmul.f32 1.0, %v1888
    %v1890 = vrcp.pop %v1887
    %v1891 = vmul.f32 1.0, %v1890
    %v1892 = vmul.f32 %v1793, %v1889
    %v1893 = vmul.f32 %v1798, %v1891
    %v1894 = vmul.f32 %v1892, %v1872
    %v1895 = vmul.f32 %v1893, %v1877
    %v1896 = vld [vmem:[%s10] sm:$0xff]
    %v1897 = vld [vmem:[%s10 + $0x8] sm:$0xff]
    %v1898 = vld [vmem:[%s10 + $0x10] sm:$0xff]
    %v1899 = vld [vmem:[%s10 + $0x18] sm:$0xff]
    %v1901 = vsel %vm50, %v1894, 0
    %v1904 = vsel %vm50, %v1895, 0
    %1906 = vmatprep.subr.mxu0 0.0
    %1907 = vmatpush1.msra.mxu0 %v1896
    %1908 = vmatprep.subr.mxu0 0.0
    %1909 = vmatpush1.msra.mxu0 %v1897
    %1910 = vmatprep.subr.mxu0 0.0
    %1911 = vmatpush1.msra.mxu0 %v1898
    %1912 = vmatprep.subr.mxu0 0.0
    %1913 = vmatpush1.msra.mxu0 %v1899
    %1914 = vmatprep.subr.mxu0 0.0
    %1915 = vmatpush1.msra.mxu0 0.0
    %1916 = vmatprep.subr.mxu0 0.0
    %1917 = vmatpush1.msra.mxu0 0.0
    %1918 = vmatprep.subr.mxu0 0.0
    %1919 = vmatpush1.msra.mxu0 0.0
    %1920 = vmatprep.subr.mxu0 0.0
    %1921 = vmatpush1.msra.mxu0 0.0
    %1922 = vmatprep.subr.mxu0 0.0
    %1923 = vmatpush1.msra.mxu0 0.0
    %1924 = vmatprep.subr.mxu0 0.0
    %1925 = vmatpush1.msra.mxu0 0.0
    %1926 = vmatprep.subr.mxu0 0.0
    %1927 = vmatpush1.msra.mxu0 0.0
    %1928 = vmatprep.subr.mxu0 0.0
    %1929 = vmatpush1.msra.mxu0 0.0
    %1930 = vmatprep.subr.mxu0 0.0
    %1931 = vmatpush1.msra.mxu0 0.0
    %1932 = vmatprep.subr.mxu0 0.0
    %1933 = vmatpush1.msra.mxu0 0.0
    %1934 = vmatprep.subr.mxu0 0.0
    %1935 = vmatpush1.msra.mxu0 0.0
    %1936 = vmatprep.subr.mxu0 0.0
    %1937 = vmatpush1.msra.mxu0 0.0
    %1938 = vmatprep.subr.mxu0 0.0
    %1939 = vmatpush1.msra.mxu0 0.0
    %1940 = vmatprep.subr.mxu0 0.0
    %1941 = vmatpush1.msra.mxu0 0.0
    %1942 = vmatprep.subr.mxu0 0.0
    %1943 = vmatpush1.msra.mxu0 0.0
    %1944 = vmatprep.subr.mxu0 0.0
    %1945 = vmatpush1.msra.mxu0 0.0
    %1946 = vmatprep.subr.mxu0 0.0
    %1947 = vmatpush1.msra.mxu0 0.0
    %1948 = vmatprep.subr.mxu0 0.0
    %1949 = vmatpush1.msra.mxu0 0.0
    %1950 = vmatprep.subr.mxu0 0.0
    %1951 = vmatpush1.msra.mxu0 0.0
    %1952 = vmatprep.subr.mxu0 0.0
    %1953 = vmatpush1.msra.mxu0 0.0
    %1954 = vmatprep.subr.mxu0 0.0
    %1955 = vmatpush1.msra.mxu0 0.0
    %1956 = vmatprep.subr.mxu0 0.0
    %1957 = vmatpush1.msra.mxu0 0.0
    %1958 = vmatprep.subr.mxu0 0.0
    %1959 = vmatpush1.msra.mxu0 0.0
    %1960 = vmatprep.subr.mxu0 0.0
    %1961 = vmatpush1.msra.mxu0 0.0
    %1962 = vmatprep.subr.mxu0 0.0
    %1963 = vmatpush1.msra.mxu0 0.0
    %1964 = vmatprep.subr.mxu0 0.0
    %1965 = vmatpush1.msra.mxu0 0.0
    %1966 = vmatprep.subr.mxu0 0.0
    %1967 = vmatpush1.msra.mxu0 0.0
    %1968 = vmatprep.subr.mxu0 0.0
    %1969 = vmatpush1.msra.mxu0 0.0
    %1970 = vmatprep.mubr.f32.mxu0 0.0
    %1971 = vmatmul.mubr.f32.gmra.mrb[0].mxu0 %v1901
    %v1972 = vpop.f32.mrb[0].mxu0
    %v1973 = vadd.f32 0.0, %v1972
    %v1974 = vpop.f32.mrb[0].mxu0
    %1975 = vmatprep.mubr.f32.mxu0 0.0
    %1976 = vmatmul.mubr.f32.gmra.mrb[0].mxu0 %v1904
    %v1977 = vpop.f32.mrb[0].mxu0
    %v1978 = vadd.f32 0.0, %v1977
    %v1979 = vpop.f32.mrb[0].mxu0
    %1980 = vdwg.mxu0
    %v1981 = vadd.f32 %v1689, %v1973
    %v1982 = vadd.f32 %v1690, %v1978
    %1983 = vst.msk [vmem:[#allocation2] sm:$0xff] %vm50, %v1981
    %1984 = vst.msk [vmem:[#allocation2 + $0x8] sm:$0xff] %vm50, %v1982
    // Predicated region
    $region50: #{tpu_custom_call.1} parent=1 // pred_check
      _
    $region51: #{tpu_custom_call.1} parent=1 // pred_check_branch
      %1986 = sbr.rel (0) target = $region53
    $region52: #{tpu_custom_call.1} parent=1 // pred_region
      %s1988 = ssub.s32 256, 256
      %1989 = vsyncadd [#allocation3], %s1988
      %s1990 = sshll.u32 [#allocation2], 4
      %s1991 = int_to_ptr.vmem [resolvable:$true] %s1990
      %1996 = dma.vmem_to_hbm [thread:$0]  %s1991, 256, %s12, [#allocation3], 128, 128, 8
    $region53: #{tpu_custom_call.1} parent=1 // pred_fallthru
      _
    // Predicated region
    $region54: #{tpu_custom_call.1} parent=1 // pred_check
      _
    $region55: #{tpu_custom_call.1} parent=1 // pred_check_branch
      %1998 = sbr.rel (0) target = $region57
    $region56: #{tpu_custom_call.1} parent=1 // pred_region
      %1999 = dma.done [#allocation3], 256
    $region57: #{tpu_custom_call.1} parent=1 // pred_fallthru
      _
    %2000 = vsyncpa [#allocation3], 1

</llo_original>
